<compile_context>
chip_gen: v7x
topology: tpu7x:2x2x1
jax: 0.10.0
libtpu: 0.0.40
codegen_flags: <defaults>
</compile_context>

<pallas_src>
import functools
import math

import numpy as np
import jax
import jax.numpy as jnp
from jax import lax
from jax.experimental import pallas as pl
from jax.experimental.pallas import tpu as pltpu


def _packed_attn_kernel(x_ref, w_ref, b_ref, qmol_ref, kmol_ref, invn_ref, o_ref,
                        *, scale, block_mols):
    """Fused QKV projection + block-diagonal masked attention + aggregation.

    x_ref    : [T, H]        packed atom features (T = block_mols * max_atoms)
    w_ref    : [H, 3*Dp]     fused lane-padded (Wq | Wk | Wv), already transposed
    b_ref    : [1, 3*Dp]     fused lane-padded bias
    qmol_ref : [T, 1] i32    molecule id of each query token (-2 for padding rows)
    kmol_ref : [1, T] i32    molecule id of each key token  (-1 for padding rows)
    invn_ref : [B, 1] f32    per-molecule aggregation scale (0 for empty molecules)
    o_ref    : [B, Dp]       per-molecule output slab (128-lane dense)
    """
    T, H = x_ref.shape
    D3 = w_ref.shape[-1]
    Dp = D3 // 3

    # --- fused Q/K/V projection: one wide MXU matmul [T, H] x [H, 3*Dp] ---
    x = x_ref[...].astype(jnp.bfloat16)
    w = w_ref[...].astype(jnp.bfloat16)
    qkv = jnp.dot(x, w, preferred_element_type=jnp.float32) + b_ref[...]
    q = qkv[:, 0 * Dp:1 * Dp].astype(jnp.bfloat16)     # 128-lane aligned slices
    k = qkv[:, 1 * Dp:2 * Dp].astype(jnp.bfloat16)
    v = qkv[:, 2 * Dp:3 * Dp].astype(jnp.bfloat16)

    # --- block-diagonal masked attention over the packed token axis (f32 softmax) ---
    s = lax.dot_general(q, k, (((1,), (1,)), ((), ())),
                        preferred_element_type=jnp.float32) * jnp.float32(scale)
    qmol = qmol_ref[...]                               # [T, 1]
    kmol = kmol_ref[...]                               # [1, T]
    s = jnp.where(qmol == kmol, s, jnp.float32(-1e30))
    s = s - jnp.max(s, axis=-1, keepdims=True)
    p = jnp.exp(s)
    p = p * pl.reciprocal(jnp.sum(p, axis=-1, keepdims=True), approx=True)
    h = jnp.dot(p.astype(jnp.bfloat16), v, preferred_element_type=jnp.float32)  # [T, Dp]

    # --- aggregation (mask padded rows + sum over atoms + scale) as one MXU matmul ---
    mol_of_row = (pl.program_id(0) * block_mols
                  + lax.broadcasted_iota(jnp.int32, (block_mols, 1), 0))  # [B, 1]
    agg = jnp.where(mol_of_row == kmol, invn_ref[...], jnp.float32(0.0))   # [B, T]
    o_ref[...] = jnp.dot(agg, h, preferred_element_type=jnp.float32)       # [B, Dp]


def atom_attention_forward(hidden_states, scope, wq, bq, wk, bk, wv, bv,
                           aggregation="mean", aggregation_norm=100.0,
                           tokens_per_block=256):
    """Pallas implementation of AtomAttention.forward
    (self-attention path, mol_feature=True, activation/dropout = None).

    tokens_per_block ~ 256 fills the v6e/v7x 256x256 MXU; use 128 on v5e.
    """
    # TODO(synk): cross-attention path (s2_state is not None) and mol_feature=False
    #             (cached_vector concat) are not implemented.
    n_atoms, hidden = hidden_states.shape
    d_out = wq.shape[0]
    n_mols = len(scope)
    sizes = np.array([n for _, n in scope], dtype=np.int32)

    # --- static packing geometry (scope is static Python metadata) ---
    A = max(8, int(-(-int(sizes.max()) // 8) * 8))         # atoms per molecule slot
    B = max(8, (int(tokens_per_block) // A) // 8 * 8)      # molecules per grid step (mult of 8)
    T = B * A                                              # packed tokens per grid step
    n_mols_pad = int(-(-n_mols // B) * B)
    n_steps = n_mols_pad // B
    n_tok = n_mols_pad * A
    Dp = max(128, int(-(-d_out // 128) * 128))             # lane-dense head width

    # --- host-side gather into the packed token layout (done once) ---
    # TODO(synk): for large inputs, replace this padded gather slab with in-kernel
    #             double-buffered make_async_copy of each molecule's contiguous
    #             [start, start+size) row window (scalar-prefetched offsets).
    idx = np.zeros((n_mols_pad, A), dtype=np.int32)
    for i, (s, n) in enumerate(scope):
        if n > 0:
            idx[i, :n] = np.arange(s, s + n)
            idx[i, n:] = s                                 # arbitrary valid rows; masked in-kernel
    x_flat = jnp.asarray(hidden_states)[idx.reshape(-1)]   # [n_tok, hidden]

    # --- per-token molecule ids (block-diagonal + key-padding mask) ---
    sizes_pad = np.zeros((n_mols_pad,), dtype=np.int32)
    sizes_pad[:n_mols] = sizes
    mol_of_tok = np.repeat(np.arange(n_mols_pad, dtype=np.int32), A)
    local_idx = np.tile(np.arange(A, dtype=np.int32), n_mols_pad)
    valid = local_idx < np.repeat(sizes_pad, A)
    qmol = np.where(valid, mol_of_tok, -2).astype(np.int32).reshape(n_tok, 1)
    kmol = np.where(valid, mol_of_tok, -1).astype(np.int32).reshape(n_steps, 1, T)

    # --- per-molecule aggregation scale ---
    if aggregation == "mean":
        inv = np.where(sizes_pad > 0, 1.0 / np.maximum(sizes_pad, 1), 0.0)
    elif aggregation == "sum":
        inv = np.where(sizes_pad > 0, 1.0, 0.0)
    elif aggregation == "norm":
        inv = np.where(sizes_pad > 0, 1.0 / aggregation_norm, 0.0)
    else:
        raise ValueError(f"unknown aggregation: {aggregation}")
    inv = inv.astype(np.float32).reshape(n_mols_pad, 1)
    # TODO(synk): size==0 in PyTorch uses self.cached_zero_vector (never defined in
    #             __init__); here empty molecules simply produce a zero vector.

    # --- fused, lane-padded projection weights (nn.Linear: y = x @ W.T + b) ---
    w_pad = jnp.zeros((hidden, 3 * Dp), jnp.float32)
    w_pad = w_pad.at[:, 0:d_out].set(wq.T)
    w_pad = w_pad.at[:, Dp:Dp + d_out].set(wk.T)
    w_pad = w_pad.at[:, 2 * Dp:2 * Dp + d_out].set(wv.T)
    b_pad = jnp.zeros((1, 3 * Dp), jnp.float32)
    b_pad = b_pad.at[0, 0:d_out].set(bq)
    b_pad = b_pad.at[0, Dp:Dp + d_out].set(bk)
    b_pad = b_pad.at[0, 2 * Dp:2 * Dp + d_out].set(bv)

    kernel = functools.partial(_packed_attn_kernel,
                               scale=1.0 / math.sqrt(d_out),
                               block_mols=B)

    out = pl.pallas_call(
        kernel,
        out_shape=jax.ShapeDtypeStruct((n_mols_pad, Dp), jnp.float32),
        grid_spec=pltpu.PrefetchScalarGridSpec(
            num_scalar_prefetch=0,
            grid=(n_steps,),
            in_specs=[
                pl.BlockSpec((T, hidden), lambda i: (i, 0)),
                pl.BlockSpec((hidden, 3 * Dp), lambda i: (0, 0)),
                pl.BlockSpec((1, 3 * Dp), lambda i: (0, 0)),
                pl.BlockSpec((T, 1), lambda i: (i, 0)),
                pl.BlockSpec((None, 1, T), lambda i: (i, 0, 0)),
                pl.BlockSpec((B, 1), lambda i: (i, 0)),
            ],
            out_specs=pl.BlockSpec((B, Dp), lambda i: (i, 0)),
        ),
        compiler_params=pltpu.CompilerParams(
            dimension_semantics=("parallel",)),
    )(x_flat, w_pad, b_pad, jnp.asarray(qmol), jnp.asarray(kmol), jnp.asarray(inv))

    return out[:n_mols, :d_out]


# ------------------------------ pure-JAX reference ------------------------------
def _reference(hidden_states, scope, wq, bq, wk, bk, wv, bv):
    q = hidden_states @ wq.T + bq
    k = hidden_states @ wk.T + bk
    v = hidden_states @ wv.T + bv
    outs = []
    for s, n in scope:
        cq, ck, cv = q[s:s + n], k[s:s + n], v[s:s + n]
        sc = (cq @ ck.T) / np.sqrt(cq.shape[-1])
        p = jax.nn.softmax(sc, axis=-1)
        h = p @ cv
        outs.append(h.sum(axis=0) / n)       # aggregation='mean'
    return jnp.stack(outs, axis=0)


if __name__ == "__main__":
    hidden = 32                                         # input_size == output_size == 32
    base_sizes = [5, 8, 3, 12, 1, 7, 9, 4, 6, 2]
    mol_sizes = base_sizes * 4                          # 40 molecules, 228 atoms -> 3 grid steps
    scope, start = [], 0
    for n in mol_sizes:
        scope.append((start, n))
        start += n
    n_atoms = start

    key = jax.random.PRNGKey(0)
    k1, k2, k3, k4, k5, k6, k7 = jax.random.split(key, 7)
    x  = jax.random.normal(k1, (n_atoms, hidden), dtype=jnp.float32)
    wq = jax.random.normal(k2, (hidden, hidden), dtype=jnp.float32) * 0.1
    wk = jax.random.normal(k3, (hidden, hidden), dtype=jnp.float32) * 0.1
    wv = jax.random.normal(k4, (hidden, hidden), dtype=jnp.float32) * 0.1
    bq = jax.random.normal(k5, (hidden,), dtype=jnp.float32) * 0.1
    bk = jax.random.normal(k6, (hidden,), dtype=jnp.float32) * 0.1
    bv = jax.random.normal(k7, (hidden,), dtype=jnp.float32) * 0.1

    out = atom_attention_forward(x, scope, wq, bq, wk, bk, wv, bv)
    out = jax.block_until_ready(out)

    ref = _reference(x, scope, wq, bq, wk, bk, wv, bv)
    np.testing.assert_allclose(np.asarray(out), np.asarray(ref),
                               rtol=5e-2, atol=5e-2)
    print("KERNEL_OK")
</pallas_src>

<mosaic_0001>
module attributes {stable_mosaic.version = 11 : i64} {
  func.func @_packed_attn_kernel(%arg0: i32, %arg1: memref<256x32xf32, #tpu.memory_space<vmem>>, %arg2: memref<32x384xf32, #tpu.memory_space<vmem>>, %arg3: memref<1x384xf32, #tpu.memory_space<vmem>>, %arg4: memref<256x1xi32, #tpu.memory_space<vmem>>, %arg5: memref<1x1x256xi32, #tpu.memory_space<vmem>>, %arg6: memref<16x1xf32, #tpu.memory_space<vmem>>, %arg7: memref<16x128xf32, #tpu.memory_space<vmem>>) attributes {dimension_semantics = [#tpu.dimension_semantics<parallel>], iteration_bounds = array<i64: 3>, scalar_prefetch = 0 : i64, scratch_operands = 0 : i64, tpu.core_type = #tpu.core_type<tc>, window_params = [{transform_indices = @transform_0, window_bounds = array<i64: 256, 32>}, {pipeline_mode = #tpu.pipeline_mode<synchronous>, transform_indices = @transform_1, window_bounds = array<i64: 32, 384>}, {pipeline_mode = #tpu.pipeline_mode<synchronous>, transform_indices = @transform_2, window_bounds = array<i64: 1, 384>}, {transform_indices = @transform_3, window_bounds = array<i64: 256, 1>}, {transform_indices = @transform_4, window_bounds = array<i64: 1, 1, 256>}, {transform_indices = @transform_5, window_bounds = array<i64: 16, 1>}, {transform_indices = @transform_6, window_bounds = array<i64: 16, 128>}]} {
    %c0 = arith.constant 0 : index
    %c0_0 = arith.constant 0 : index
    %0 = vector.load %arg1[%c0, %c0_0] : memref<256x32xf32, #tpu.memory_space<vmem>>, vector<256x32xf32>
    %1 = arith.truncf %0 : vector<256x32xf32> to vector<256x32xbf16>
    %c0_1 = arith.constant 0 : index
    %c0_2 = arith.constant 0 : index
    %2 = vector.load %arg2[%c0_1, %c0_2] : memref<32x384xf32, #tpu.memory_space<vmem>>, vector<32x384xf32>
    %3 = arith.truncf %2 : vector<32x384xf32> to vector<32x384xbf16>
    %cst = arith.constant dense<0.000000e+00> : vector<256x384xf32>
    %4 = tpu.matmul %1, %3, %cst {dimension_numbers = #tpu.dot_dimension_numbers<[1], [0], [0], [1], [0, 0, 1, 1], [], []>} : vector<256x32xbf16>, vector<32x384xbf16>, vector<256x384xf32> -> vector<256x384xf32>
    %c0_3 = arith.constant 0 : index
    %c0_4 = arith.constant 0 : index
    %5 = vector.load %arg3[%c0_3, %c0_4] : memref<1x384xf32, #tpu.memory_space<vmem>>, vector<1x384xf32>
    %6 = vector.broadcast %5 : vector<1x384xf32> to vector<256x384xf32>
    %7 = arith.addf %4, %6 : vector<256x384xf32>
    %8 = vector.extract_strided_slice %7 {offsets = [0, 0], sizes = [256, 128], strides = [1, 1]} : vector<256x384xf32> to vector<256x128xf32>
    %9 = arith.truncf %8 : vector<256x128xf32> to vector<256x128xbf16>
    %10 = vector.extract_strided_slice %7 {offsets = [0, 128], sizes = [256, 128], strides = [1, 1]} : vector<256x384xf32> to vector<256x128xf32>
    %11 = arith.truncf %10 : vector<256x128xf32> to vector<256x128xbf16>
    %12 = vector.extract_strided_slice %7 {offsets = [0, 256], sizes = [256, 128], strides = [1, 1]} : vector<256x384xf32> to vector<256x128xf32>
    %13 = arith.truncf %12 : vector<256x128xf32> to vector<256x128xbf16>
    %cst_5 = arith.constant dense<0.000000e+00> : vector<256x256xf32>
    %14 = tpu.matmul %9, %11, %cst_5 {dimension_numbers = #tpu.dot_dimension_numbers<[1], [1], [0], [0], [0, 0, 1, 0], [], []>} : vector<256x128xbf16>, vector<256x128xbf16>, vector<256x256xf32> -> vector<256x256xf32>
    %cst_6 = arith.constant 0.176776692 : f32
    %15 = vector.broadcast %cst_6 : f32 to vector<256x256xf32>
    %16 = arith.mulf %14, %15 : vector<256x256xf32>
    %c0_7 = arith.constant 0 : index
    %c0_8 = arith.constant 0 : index
    %17 = vector.load %arg4[%c0_7, %c0_8] : memref<256x1xi32, #tpu.memory_space<vmem>>, vector<256x1xi32>
    %c0_9 = arith.constant 0 : index
    %c0_10 = arith.constant 0 : index
    %c0_11 = arith.constant 0 : index
    %18 = vector.load %arg5[%c0_9, %c0_10, %c0_11] : memref<1x1x256xi32, #tpu.memory_space<vmem>>, vector<1x1x256xi32>
    %19 = vector.shape_cast %18 : vector<1x1x256xi32> to vector<1x256xi32>
    %20 = vector.broadcast %17 : vector<256x1xi32> to vector<256x256xi32>
    %21 = vector.broadcast %19 : vector<1x256xi32> to vector<256x256xi32>
    %22 = arith.cmpi eq, %20, %21 : vector<256x256xi32>
    %cst_12 = arith.constant -1.000000e+30 : f32
    %23 = vector.broadcast %cst_12 : f32 to vector<256x256xf32>
    %24 = arith.select %22, %16, %23 : vector<256x256xi1>, vector<256x256xf32>
    %cst_13 = arith.constant dense<0xFF800000> : vector<256xf32>
    %25 = vector.multi_reduction <maximumf>, %24, %cst_13 [1] : vector<256x256xf32> to vector<256xf32>
    %26 = vector.shape_cast %25 : vector<256xf32> to vector<256x1xf32>
    %27 = vector.broadcast %26 : vector<256x1xf32> to vector<256x256xf32>
    %28 = arith.subf %24, %27 : vector<256x256xf32>
    %29 = math.exp %28 : vector<256x256xf32>
    %cst_14 = arith.constant dense<0.000000e+00> : vector<256xf32>
    %30 = vector.multi_reduction <add>, %29, %cst_14 [1] : vector<256x256xf32> to vector<256xf32>
    %31 = vector.shape_cast %30 : vector<256xf32> to vector<256x1xf32>
    %32 = tpu.reciprocal %31 {approx = true} : vector<256x1xf32> -> vector<256x1xf32>
    %33 = vector.broadcast %32 : vector<256x1xf32> to vector<256x256xf32>
    %34 = arith.mulf %29, %33 : vector<256x256xf32>
    %35 = arith.truncf %34 : vector<256x256xf32> to vector<256x256xbf16>
    %cst_15 = arith.constant dense<0.000000e+00> : vector<256x128xf32>
    %36 = tpu.matmul %35, %13, %cst_15 {dimension_numbers = #tpu.dot_dimension_numbers<[1], [0], [0], [1], [0, 0, 1, 1], [], []>} : vector<256x256xbf16>, vector<256x128xbf16>, vector<256x128xf32> -> vector<256x128xf32>
    %c16_i32 = arith.constant 16 : i32
    %37 = arith.muli %arg0, %c16_i32 : i32
    %38 = tpu.iota {dimensions = array<i32: 0>} : vector<16x1xi32>
    %39 = vector.broadcast %37 : i32 to vector<16x1xi32>
    %40 = arith.addi %39, %38 : vector<16x1xi32>
    %41 = vector.broadcast %40 : vector<16x1xi32> to vector<16x256xi32>
    %42 = vector.broadcast %19 : vector<1x256xi32> to vector<16x256xi32>
    %43 = arith.cmpi eq, %41, %42 : vector<16x256xi32>
    %c0_16 = arith.constant 0 : index
    %c0_17 = arith.constant 0 : index
    %44 = vector.load %arg6[%c0_16, %c0_17] : memref<16x1xf32, #tpu.memory_space<vmem>>, vector<16x1xf32>
    %cst_18 = arith.constant 0.000000e+00 : f32
    %45 = vector.shape_cast %44 : vector<16x1xf32> to vector<16x1xf32>
    %46 = vector.broadcast %45 : vector<16x1xf32> to vector<16x256xf32>
    %47 = vector.broadcast %cst_18 : f32 to vector<16x256xf32>
    %48 = arith.select %43, %46, %47 : vector<16x256xi1>, vector<16x256xf32>
    %cst_19 = arith.constant dense<0.000000e+00> : vector<16x128xf32>
    %49 = tpu.matmul %48, %36, %cst_19 {dimension_numbers = #tpu.dot_dimension_numbers<[1], [0], [0], [1], [0, 0, 1, 1], [], []>} : vector<16x256xf32>, vector<256x128xf32>, vector<16x128xf32> -> vector<16x128xf32>
    %c0_20 = arith.constant 0 : index
    %c0_21 = arith.constant 0 : index
    %50 = vector.load %arg7[%c0_20, %c0_21] : memref<16x128xf32, #tpu.memory_space<vmem>>, vector<16x128xf32>
    tpu.vector_store %arg7[%c0_20, %c0_21], %49 {strides = array<i32>} : memref<16x128xf32, #tpu.memory_space<vmem>>, vector<16x128xf32>,
    return
  }
  func.func @transform_0(%arg0: i32) -> (i32, i32) {
    %c0_i32 = arith.constant 0 : i32
    %c0_i32_0 = arith.constant 0 : i32
    return %arg0, %c0_i32 : i32, i32
  }
  func.func @transform_1(%arg0: i32) -> (i32, i32) {
    %c0_i32 = arith.constant 0 : i32
    %c0_i32_0 = arith.constant 0 : i32
    %c0_i32_1 = arith.constant 0 : i32
    return %c0_i32, %c0_i32_0 : i32, i32
  }
  func.func @transform_2(%arg0: i32) -> (i32, i32) {
    %c0_i32 = arith.constant 0 : i32
    %c0_i32_0 = arith.constant 0 : i32
    %c0_i32_1 = arith.constant 0 : i32
    return %c0_i32, %c0_i32_0 : i32, i32
  }
  func.func @transform_3(%arg0: i32) -> (i32, i32) {
    %c0_i32 = arith.constant 0 : i32
    %c0_i32_0 = arith.constant 0 : i32
    return %arg0, %c0_i32 : i32, i32
  }
  func.func @transform_4(%arg0: i32) -> (i32, i32, i32) {
    %c0_i32 = arith.constant 0 : i32
    %c0_i32_0 = arith.constant 0 : i32
    %c0_i32_1 = arith.constant 0 : i32
    return %arg0, %c0_i32, %c0_i32_0 : i32, i32, i32
  }
  func.func @transform_5(%arg0: i32) -> (i32, i32) {
    %c0_i32 = arith.constant 0 : i32
    %c0_i32_0 = arith.constant 0 : i32
    return %arg0, %c0_i32 : i32, i32
  }
  func.func @transform_6(%arg0: i32) -> (i32, i32) {
    %c0_i32 = arith.constant 0 : i32
    %c0_i32_0 = arith.constant 0 : i32
    return %arg0, %c0_i32 : i32, i32
  }
}

</mosaic_0001>

<llo_original>
// kernel: tpu_custom_call.1
$region0: #{tpu_custom_call.1}
  #allocation0 [shape = 'u32[]', space=smem, size = 0x4, offset = 0x4, fixed_abs, tag = 'smem constant byte address 0x4 - core index']
  #allocation1 [shape = 'u32[144,128]{1,0:T(1,128)}', space=vmem, size = 0x12000, scoped, tag = 'internal scratch']
  %s0 = inlined_call_operand.vmem [shape: f32[768,32], index: 0, kind: input, shape index: {}]
  %s1 = inlined_call_operand.vmem [shape: f32[32,384], index: 1, kind: input, shape index: {}]
  %s2 = inlined_call_operand.vmem [shape: f32[1,384], index: 2, kind: input, shape index: {}]
  %s3 = inlined_call_operand.vmem [shape: s32[768,1], index: 3, kind: input, shape index: {}]
  %s4 = inlined_call_operand.vmem [shape: s32[3,1,256], index: 4, kind: input, shape index: {}]
  %s5 = inlined_call_operand.vmem [shape: f32[48,1], index: 5, kind: input, shape index: {}]
  %s6 = inlined_call_operand.hbm [shape: f32[48,128], index: 6, kind: output, shape index: {}]
  %s7 = sld [smem:[#allocation0]]
  $region57: #{tpu_custom_call.1} parent=0
    _
  %s9 = ssub.s32 1, %s7
  %s10 = scalar_select 0, %s9, %s7
  $region1: #{tpu_custom_call.1} parent=0
    #allocation2 [shape = 'u8[16384]{0}', space=vmem, size = 0x4000, scoped, tag = 'output window, operand 0']
    #allocation3 [shape = 's32[2]{0}', space=sflag, size = 0x8, scoped, tag = 'scoped memory for tpu_custom_call.1']
    %11 = vsyncpa [#allocation3], 0
    %s12 = scalar_lea.sflag [#allocation3], 1
    %13 = vsyncpa %s12, 0
    loop: start=0, step=1, limit=5
    $region2: #{tpu_custom_call.1} parent=1 // loop_pre_header
      _
    $region3: #{tpu_custom_call.1} parent=1 // loop_header
      %s15 = sphi 0, %s19
      %p16 = scmp.ge.s32.totalorder %s15, 5
      %s25 = sphi 0, %s27
      %s28 = sphi 0, %s25
      %s29 = sphi 0, %s28
      %s45 = sphi 0, %s29
      %s49 = sphi 0, %s49
      %s51 = sphi 0, %s49
      %s52 = sphi 0, %s51
      %s66 = sphi 0, %s52
      %s70 = sphi 0, %s70
      %s72 = sphi 0, %s70
      %s73 = sphi 0, %s72
      %s87 = sphi 0, %s73
      %s93 = sphi 0, %s95
      %s96 = sphi 0, %s93
      %s97 = sphi 0, %s96
      %s113 = sphi 0, %s97
      %s119 = sphi 0, %s121
      %s122 = sphi 0, %s119
      %s123 = sphi 0, %s122
      %s139 = sphi 0, %s123
      %s145 = sphi 0, %s147
      %s148 = sphi 0, %s145
      %s149 = sphi 0, %s148
      %s165 = sphi 0, %s149
      %s171 = sphi 0, %s173
      %s174 = sphi 0, %s171
      %s175 = sphi 0, %s174
      %s191 = sphi 0, %s175
    $region4: #{tpu_custom_call.1} parent=1 // loop_header_branch
      %18 = sbr.rel (%p16) target = $region8
    $region5: #{tpu_custom_call.1} parent=1 // loop_body
      %s20 = ssub.s32 %s15, 1
      %s21 = ssub.s32 %s15, 2
      %s22 = sadd.s32 %s15, 1
      %s23 = ssub.s32 %s15, %s22
      %p24 = scmp.eq.s32.totalorder %s23, 0
      %s26 = sadd.s32 %s25, 1
      %s27 = scalar_select %p24, %s25, %s26
      %p30 = pneg %p24
      %p31 = scmp.eq.s32.totalorder %s15, 2
      %p32 = por %p30, %p31
      %p33 = scmp.ne.s32.totalorder %s25, %s28
      %p34 = scmp.eq.s32.totalorder %s15, 0
      %p35 = por %p33, %p34
      %p36 = scmp.ne.s32.totalorder %s25, %s28
      %p37 = scmp.eq.s32.totalorder %s20, 2
      %p38 = por %p36, %p37
      %p39 = scmp.ne.s32.totalorder %s28, %s29
      %p40 = scmp.eq.s32.totalorder %s20, 0
      %p41 = por %p39, %p40
      %p42 = scmp.ne.s32.totalorder %s28, %s29
      %p43 = scmp.eq.s32.totalorder %s21, 2
      %p44 = por %p42, %p43
      %p46 = scmp.ne.s32.totalorder %s29, %s45
      %p47 = scmp.eq.s32.totalorder %s21, 0
      %p48 = por %p46, %p47
      %s50 = sadd.s32 %s49, 1
      %p53 = scmp.eq.s32.totalorder %s15, 2
      %p54 = scmp.ne.s32.totalorder %s49, %s51
      %p55 = scmp.eq.s32.totalorder %s15, 0
      %p56 = por %p54, %p55
      %p57 = scmp.ne.s32.totalorder %s49, %s51
      %p58 = scmp.eq.s32.totalorder %s20, 2
      %p59 = por %p57, %p58
      %p60 = scmp.ne.s32.totalorder %s51, %s52
      %p61 = scmp.eq.s32.totalorder %s20, 0
      %p62 = por %p60, %p61
      %p63 = scmp.ne.s32.totalorder %s51, %s52
      %p64 = scmp.eq.s32.totalorder %s21, 2
      %p65 = por %p63, %p64
      %p67 = scmp.ne.s32.totalorder %s52, %s66
      %p68 = scmp.eq.s32.totalorder %s21, 0
      %p69 = por %p67, %p68
      %s71 = sadd.s32 %s70, 1
      %p74 = scmp.eq.s32.totalorder %s15, 2
      %p75 = scmp.ne.s32.totalorder %s70, %s72
      %p76 = scmp.eq.s32.totalorder %s15, 0
      %p77 = por %p75, %p76
      %p78 = scmp.ne.s32.totalorder %s70, %s72
      %p79 = scmp.eq.s32.totalorder %s20, 2
      %p80 = por %p78, %p79
      %p81 = scmp.ne.s32.totalorder %s72, %s73
      %p82 = scmp.eq.s32.totalorder %s20, 0
      %p83 = por %p81, %p82
      %p84 = scmp.ne.s32.totalorder %s72, %s73
      %p85 = scmp.eq.s32.totalorder %s21, 2
      %p86 = por %p84, %p85
      %p88 = scmp.ne.s32.totalorder %s73, %s87
      %p89 = scmp.eq.s32.totalorder %s21, 0
      %p90 = por %p88, %p89
      %s91 = ssub.s32 %s15, %s22
      %p92 = scmp.eq.s32.totalorder %s91, 0
      %s94 = sadd.s32 %s93, 1
      %s95 = scalar_select %p92, %s93, %s94
      %p98 = pneg %p92
      %p99 = scmp.eq.s32.totalorder %s15, 2
      %p100 = por %p98, %p99
      %p101 = scmp.ne.s32.totalorder %s93, %s96
      %p102 = scmp.eq.s32.totalorder %s15, 0
      %p103 = por %p101, %p102
      %p104 = scmp.ne.s32.totalorder %s93, %s96
      %p105 = scmp.eq.s32.totalorder %s20, 2
      %p106 = por %p104, %p105
      %p107 = scmp.ne.s32.totalorder %s96, %s97
      %p108 = scmp.eq.s32.totalorder %s20, 0
      %p109 = por %p107, %p108
      %p110 = scmp.ne.s32.totalorder %s96, %s97
      %p111 = scmp.eq.s32.totalorder %s21, 2
      %p112 = por %p110, %p111
      %p114 = scmp.ne.s32.totalorder %s97, %s113
      %p115 = scmp.eq.s32.totalorder %s21, 0
      %p116 = por %p114, %p115
      %s117 = ssub.s32 %s15, %s22
      %p118 = scmp.eq.s32.totalorder %s117, 0
      %s120 = sadd.s32 %s119, 1
      %s121 = scalar_select %p118, %s119, %s120
      %p124 = pneg %p118
      %p125 = scmp.eq.s32.totalorder %s15, 2
      %p126 = por %p124, %p125
      %p127 = scmp.ne.s32.totalorder %s119, %s122
      %p128 = scmp.eq.s32.totalorder %s15, 0
      %p129 = por %p127, %p128
      %p130 = scmp.ne.s32.totalorder %s119, %s122
      %p131 = scmp.eq.s32.totalorder %s20, 2
      %p132 = por %p130, %p131
      %p133 = scmp.ne.s32.totalorder %s122, %s123
      %p134 = scmp.eq.s32.totalorder %s20, 0
      %p135 = por %p133, %p134
      %p136 = scmp.ne.s32.totalorder %s122, %s123
      %p137 = scmp.eq.s32.totalorder %s21, 2
      %p138 = por %p136, %p137
      %p140 = scmp.ne.s32.totalorder %s123, %s139
      %p141 = scmp.eq.s32.totalorder %s21, 0
      %p142 = por %p140, %p141
      %s143 = ssub.s32 %s15, %s22
      %p144 = scmp.eq.s32.totalorder %s143, 0
      %s146 = sadd.s32 %s145, 1
      %s147 = scalar_select %p144, %s145, %s146
      %p150 = pneg %p144
      %p151 = scmp.eq.s32.totalorder %s15, 2
      %p152 = por %p150, %p151
      %p153 = scmp.ne.s32.totalorder %s145, %s148
      %p154 = scmp.eq.s32.totalorder %s15, 0
      %p155 = por %p153, %p154
      %p156 = scmp.ne.s32.totalorder %s145, %s148
      %p157 = scmp.eq.s32.totalorder %s20, 2
      %p158 = por %p156, %p157
      %p159 = scmp.ne.s32.totalorder %s148, %s149
      %p160 = scmp.eq.s32.totalorder %s20, 0
      %p161 = por %p159, %p160
      %p162 = scmp.ne.s32.totalorder %s148, %s149
      %p163 = scmp.eq.s32.totalorder %s21, 2
      %p164 = por %p162, %p163
      %p166 = scmp.ne.s32.totalorder %s149, %s165
      %p167 = scmp.eq.s32.totalorder %s21, 0
      %p168 = por %p166, %p167
      %s169 = ssub.s32 %s15, %s22
      %p170 = scmp.eq.s32.totalorder %s169, 0
      %s172 = sadd.s32 %s171, 1
      %s173 = scalar_select %p170, %s171, %s172
      %p176 = pneg %p170
      %p177 = scmp.eq.s32.totalorder %s15, 2
      %p178 = por %p176, %p177
      %p179 = scmp.ne.s32.totalorder %s171, %s174
      %p180 = scmp.eq.s32.totalorder %s15, 0
      %p181 = por %p179, %p180
      %p182 = scmp.ne.s32.totalorder %s171, %s174
      %p183 = scmp.eq.s32.totalorder %s20, 2
      %p184 = por %p182, %p183
      %p185 = scmp.ne.s32.totalorder %s174, %s175
      %p186 = scmp.eq.s32.totalorder %s20, 0
      %p187 = por %p185, %p186
      %p188 = scmp.ne.s32.totalorder %s174, %s175
      %p189 = scmp.eq.s32.totalorder %s21, 2
      %p190 = por %p188, %p189
      %p192 = scmp.ne.s32.totalorder %s175, %s191
      %p193 = scmp.eq.s32.totalorder %s21, 0
      %p194 = por %p192, %p193
      %p195 = scmp.le.s32.totalorder 1, %s15
      %p196 = scmp.lt.s32.totalorder %s15, 4
      %p197 = pnand %p195, %p196
      %p198 = pneg %p197
      // Predicated region
      $region9: #{tpu_custom_call.1} parent=5 // pred_check
        _
      $region10: #{tpu_custom_call.1} parent=5 // pred_check_branch
        %200 = sbr.rel (%p197) target = $region12
      $region11: #{tpu_custom_call.1} parent=5 // pred_region
        %s201 = ssub.s32 %s15, 1
        // Predicated region
        $region13: #{tpu_custom_call.1} parent=11 // pred_check
          %p202 = pneg %p62
        $region14: #{tpu_custom_call.1} parent=11 // pred_check_branch
          %204 = sbr.rel (%p202) target = $region16
        $region15: #{tpu_custom_call.1} parent=11 // pred_region
          _
        $region16: #{tpu_custom_call.1} parent=11 // pred_fallthru
          _
        // Predicated region
        $region17: #{tpu_custom_call.1} parent=11 // pred_check
          %p205 = pneg %p83
        $region18: #{tpu_custom_call.1} parent=11 // pred_check_branch
          %207 = sbr.rel (%p205) target = $region20
        $region19: #{tpu_custom_call.1} parent=11 // pred_region
          _
        $region20: #{tpu_custom_call.1} parent=11 // pred_fallthru
          _
      $region12: #{tpu_custom_call.1} parent=5 // pred_fallthru
        _
      %p208 = scmp.lt.s32.totalorder %s15, 3
      // Predicated region
      $region21: #{tpu_custom_call.1} parent=5 // pred_check
        %p209 = pneg %p208
      $region22: #{tpu_custom_call.1} parent=5 // pred_check_branch
        %211 = sbr.rel (%p209) target = $region24
      $region23: #{tpu_custom_call.1} parent=5 // pred_region
        // Predicated region
        $region25: #{tpu_custom_call.1} parent=23 // pred_check
          %p212 = pneg %p35
        $region26: #{tpu_custom_call.1} parent=23 // pred_check_branch
          %214 = sbr.rel (%p212) target = $region28
        $region27: #{tpu_custom_call.1} parent=23 // pred_region
          %s215 = smul.u32 32, %s15
          %p216 = scmp.lt.s32.totalorder %s215, 95
          %s217 = scalar_select %p216, %s215, 95
          %s218 = smul.addr %s217, 8
          %s219 = scalar_lea.vmem %s0, %s218
          %s220 = smul.u32 32, %s15
        $region28: #{tpu_custom_call.1} parent=23 // pred_fallthru
          _
        // Predicated region
        $region29: #{tpu_custom_call.1} parent=23 // pred_check
          %p221 = pneg %p103
        $region30: #{tpu_custom_call.1} parent=23 // pred_check_branch
          %223 = sbr.rel (%p221) target = $region32
        $region31: #{tpu_custom_call.1} parent=23 // pred_region
          %s224 = smul.u32 32, %s15
          %p225 = scmp.lt.s32.totalorder %s224, 95
          %s226 = scalar_select %p225, %s224, 95
          %s227 = smul.addr %s226, 8
          %s228 = scalar_lea.vmem %s3, %s227
          %s229 = smul.u32 32, %s15
        $region32: #{tpu_custom_call.1} parent=23 // pred_fallthru
          _
        // Predicated region
        $region33: #{tpu_custom_call.1} parent=23 // pred_check
          %p230 = pneg %p129
        $region34: #{tpu_custom_call.1} parent=23 // pred_check_branch
          %232 = sbr.rel (%p230) target = $region36
        $region35: #{tpu_custom_call.1} parent=23 // pred_region
          %p233 = scmp.lt.s32.totalorder %s15, 2
          %s234 = scalar_select %p233, %s15, 2
          %s235 = smul.addr %s234, 2
          %s236 = scalar_lea.vmem %s4, %s235
        $region36: #{tpu_custom_call.1} parent=23 // pred_fallthru
          _
        // Predicated region
        $region37: #{tpu_custom_call.1} parent=23 // pred_check
          %p237 = pneg %p155
        $region38: #{tpu_custom_call.1} parent=23 // pred_check_branch
          %239 = sbr.rel (%p237) target = $region40
        $region39: #{tpu_custom_call.1} parent=23 // pred_region
          %s240 = smul.u32 2, %s15
          %p241 = scmp.lt.s32.totalorder %s240, 5
          %s242 = scalar_select %p241, %s240, 5
          %s243 = smul.addr %s242, 8
          %s244 = scalar_lea.vmem %s5, %s243
          %s245 = smul.u32 2, %s15
        $region40: #{tpu_custom_call.1} parent=23 // pred_fallthru
          _
      $region24: #{tpu_custom_call.1} parent=5 // pred_fallthru
        _
      %p246 = scmp.le.s32.totalorder 1, %s15
      %p247 = scmp.lt.s32.totalorder %s15, 4
      %p248 = pnand %p246, %p247
      %p249 = pneg %p248
      // Predicated region
      $region41: #{tpu_custom_call.1} parent=5 // pred_check
        _
      $region42: #{tpu_custom_call.1} parent=5 // pred_check_branch
        %251 = sbr.rel (%p248) target = $region44
      $region43: #{tpu_custom_call.1} parent=5 // pred_region
        %s252 = ssub.s32 %s15, 1
        %s253 = smul.u32 32, %s20
        %p254 = scmp.lt.s32.totalorder %s253, 95
        %s255 = scalar_select %p254, %s253, 95
        %s256 = smul.addr %s255, 8
        %s257 = scalar_lea.vmem %s0, %s256
        %p258 = pneg %p41
        %p259 = pneg %p38
        %p260 = pneg %p62
        %p261 = pneg %p59
        %p262 = pneg %p83
        %p263 = pneg %p80
        %s264 = smul.u32 32, %s20
        %p265 = scmp.lt.s32.totalorder %s264, 95
        %s266 = scalar_select %p265, %s264, 95
        %s267 = smul.addr %s266, 8
        %s268 = scalar_lea.vmem %s3, %s267
        %p269 = pneg %p109
        %p270 = pneg %p106
        %p271 = scmp.lt.s32.totalorder %s20, 2
        %s272 = scalar_select %p271, %s20, 2
        %s273 = smul.addr %s272, 2
        %s274 = scalar_lea.vmem %s4, %s273
        %p275 = pneg %p135
        %p276 = pneg %p132
        %s277 = smul.u32 2, %s20
        %p278 = scmp.lt.s32.totalorder %s277, 5
        %s279 = scalar_select %p278, %s277, 5
        %s280 = smul.addr %s279, 8
        %s281 = scalar_lea.vmem %s5, %s280
        %p282 = pneg %p161
        %p283 = pneg %p158
        %p284 = pneg %p187
        %p285 = pneg %p184
        %s286 = sand.u32 %s174, 1
        %s287 = scalar_lea.sflag [#allocation3], %s286
        %s288 = sand.u32 %s174, 1
        %s289 = smul.addr %s288, 16
        %s290 = scalar_lea.vmem [#allocation2], %s289
        %s291 = smul.u32 32, %s20
        %p292 = scmp.lt.s32.totalorder %s291, 95
        %s293 = scalar_select %p292, %s291, 95
        %s294 = smul.addr %s293, 8
        %s295 = scalar_lea.vmem %s0, %s294
        %s296 = smul.u32 32, %s20
        %s297 = smul.u32 32, %s20
        %p298 = scmp.lt.s32.totalorder %s297, 95
        %s299 = scalar_select %p298, %s297, 95
        %s300 = smul.addr %s299, 8
        %s301 = scalar_lea.vmem %s3, %s300
        %s302 = smul.u32 32, %s20
        %p303 = scmp.lt.s32.totalorder %s20, 2
        %s304 = scalar_select %p303, %s20, 2
        %s305 = smul.addr %s304, 2
        %s306 = scalar_lea.vmem %s4, %s305
        %s307 = smul.u32 2, %s20
        %p308 = scmp.lt.s32.totalorder %s307, 5
        %s309 = scalar_select %p308, %s307, 5
        %s310 = smul.addr %s309, 8
        %s311 = scalar_lea.vmem %s5, %s310
        %s312 = smul.u32 2, %s20
        %s313 = smul.u32 2, %s20
        %v315 = vld [vmem:[%s295] sm:$0xff]
        %v316 = vld [vmem:[%s295 + $0x8] sm:$0xff]
        %v317 = vld [vmem:[%s295 + $0x10] sm:$0xff]
        %v318 = vld [vmem:[%s295 + $0x18] sm:$0xff]
        %v319 = vld [vmem:[%s295 + $0x20] sm:$0xff]
        %v320 = vld [vmem:[%s295 + $0x28] sm:$0xff]
        %v321 = vld [vmem:[%s295 + $0x30] sm:$0xff]
        %v322 = vld [vmem:[%s295 + $0x38] sm:$0xff]
        %v323 = vld [vmem:[%s295 + $0x40] sm:$0xff]
        %v324 = vld [vmem:[%s295 + $0x48] sm:$0xff]
        %v325 = vld [vmem:[%s295 + $0x50] sm:$0xff]
        %v326 = vld [vmem:[%s295 + $0x58] sm:$0xff]
        %v327 = vld [vmem:[%s295 + $0x60] sm:$0xff]
        %v328 = vld [vmem:[%s295 + $0x68] sm:$0xff]
        %v329 = vld [vmem:[%s295 + $0x70] sm:$0xff]
        %v330 = vld [vmem:[%s295 + $0x78] sm:$0xff]
        %v331 = vld [vmem:[%s295 + $0x80] sm:$0xff]
        %v332 = vld [vmem:[%s295 + $0x88] sm:$0xff]
        %v333 = vld [vmem:[%s295 + $0x90] sm:$0xff]
        %v334 = vld [vmem:[%s295 + $0x98] sm:$0xff]
        %v335 = vld [vmem:[%s295 + $0xa0] sm:$0xff]
        %v336 = vld [vmem:[%s295 + $0xa8] sm:$0xff]
        %v337 = vld [vmem:[%s295 + $0xb0] sm:$0xff]
        %v338 = vld [vmem:[%s295 + $0xb8] sm:$0xff]
        %v339 = vld [vmem:[%s295 + $0xc0] sm:$0xff]
        %v340 = vld [vmem:[%s295 + $0xc8] sm:$0xff]
        %v341 = vld [vmem:[%s295 + $0xd0] sm:$0xff]
        %v342 = vld [vmem:[%s295 + $0xd8] sm:$0xff]
        %v343 = vld [vmem:[%s295 + $0xe0] sm:$0xff]
        %v344 = vld [vmem:[%s295 + $0xe8] sm:$0xff]
        %v345 = vld [vmem:[%s295 + $0xf0] sm:$0xff]
        %v346 = vld [vmem:[%s295 + $0xf8] sm:$0xff]
        %v347 = vpack.c.bf16 %v316, %v315
        %v348 = vpack.c.bf16 %v318, %v317
        %v349 = vpack.c.bf16 %v320, %v319
        %v350 = vpack.c.bf16 %v322, %v321
        %v351 = vpack.c.bf16 %v324, %v323
        %v352 = vpack.c.bf16 %v326, %v325
        %v353 = vpack.c.bf16 %v328, %v327
        %v354 = vpack.c.bf16 %v330, %v329
        %v355 = vpack.c.bf16 %v332, %v331
        %v356 = vpack.c.bf16 %v334, %v333
        %v357 = vpack.c.bf16 %v336, %v335
        %v358 = vpack.c.bf16 %v338, %v337
        %v359 = vpack.c.bf16 %v340, %v339
        %v360 = vpack.c.bf16 %v342, %v341
        %v361 = vpack.c.bf16 %v344, %v343
        %v362 = vpack.c.bf16 %v346, %v345
        %v363 = vld [vmem:[%s1] sm:$0xff]
        %v364 = vld [vmem:[%s1 + $0x8] sm:$0xff]
        %v365 = vld [vmem:[%s1 + $0x10] sm:$0xff]
        %v366 = vld [vmem:[%s1 + $0x18] sm:$0xff]
        %v367 = vld [vmem:[%s1 + $0x20] sm:$0xff]
        %v368 = vld [vmem:[%s1 + $0x28] sm:$0xff]
        %v369 = vld [vmem:[%s1 + $0x30] sm:$0xff]
        %v370 = vld [vmem:[%s1 + $0x38] sm:$0xff]
        %v371 = vld [vmem:[%s1 + $0x40] sm:$0xff]
        %v372 = vld [vmem:[%s1 + $0x48] sm:$0xff]
        %v373 = vld [vmem:[%s1 + $0x50] sm:$0xff]
        %v374 = vld [vmem:[%s1 + $0x58] sm:$0xff]
        %v375 = vpack.c.bf16 %v366, %v363
        %v376 = vpack.c.bf16 %v367, %v364
        %v377 = vpack.c.bf16 %v368, %v365
        %v378 = vpack.c.bf16 %v372, %v369
        %v379 = vpack.c.bf16 %v373, %v370
        %v380 = vpack.c.bf16 %v374, %v371
        %v381 = vld [vmem:[%s2] sm:$0x7]
        %v383 = vlaneseq
        %v384 = vshrl.u32 %v383, 7
        %v385 = vsub.s32 0, %v384
        %v386 = vrot.slane %v381, %v385
        %v387 = vlaneseq
        %v388 = vshrl.u32 %v387, 7
        %v389 = vsub.s32 1, %v388
        %v390 = vrot.slane %v381, %v389
        %v391 = vlaneseq
        %v392 = vshrl.u32 %v391, 7
        %v393 = vsub.s32 2, %v392
        %v394 = vrot.slane %v381, %v393
        %vm398 = vcmask 261120
        %v400 = vsel %vm398, %v347, 0
        %v403 = vsel %vm398, %v348, 0
        %v406 = vsel %vm398, %v349, 0
        %v409 = vsel %vm398, %v350, 0
        %v412 = vsel %vm398, %v351, 0
        %v415 = vsel %vm398, %v352, 0
        %v418 = vsel %vm398, %v353, 0
        %v421 = vsel %vm398, %v354, 0
        %v424 = vsel %vm398, %v355, 0
        %v427 = vsel %vm398, %v356, 0
        %v430 = vsel %vm398, %v357, 0
        %v433 = vsel %vm398, %v358, 0
        %v436 = vsel %vm398, %v359, 0
        %v439 = vsel %vm398, %v360, 0
        %v442 = vsel %vm398, %v361, 0
        %v445 = vsel %vm398, %v362, 0
        %447 = vmatprep.subr.bf16.mxu0 %v376
        %448 = vmatpush1.bf16.msra.mxu0 %v375
        %449 = vmatprep.subr.bf16.mxu0 %v379
        %450 = vmatpush1.bf16.msra.mxu0 %v378
        %451 = vmatprep.subr.bf16.mxu0 0
        %452 = vmatpush1.bf16.msra.mxu0 0
        %453 = vmatprep.subr.bf16.mxu0 0
        %454 = vmatpush1.bf16.msra.mxu0 0
        %455 = vmatprep.subr.bf16.mxu0 0
        %456 = vmatpush1.bf16.msra.mxu0 0
        %457 = vmatprep.subr.bf16.mxu0 0
        %458 = vmatpush1.bf16.msra.mxu0 0
        %459 = vmatprep.subr.bf16.mxu0 0
        %460 = vmatpush1.bf16.msra.mxu0 0
        %461 = vmatprep.subr.bf16.mxu0 0
        %462 = vmatpush1.bf16.msra.mxu0 0
        %463 = vmatprep.subr.bf16.mxu0 0
        %464 = vmatpush1.bf16.msra.mxu0 0
        %465 = vmatprep.subr.bf16.mxu0 0
        %466 = vmatpush1.bf16.msra.mxu0 0
        %467 = vmatprep.subr.bf16.mxu0 0
        %468 = vmatpush1.bf16.msra.mxu0 0
        %469 = vmatprep.subr.bf16.mxu0 0
        %470 = vmatpush1.bf16.msra.mxu0 0
        %471 = vmatprep.subr.bf16.mxu0 0
        %472 = vmatpush1.bf16.msra.mxu0 0
        %473 = vmatprep.subr.bf16.mxu0 0
        %474 = vmatpush1.bf16.msra.mxu0 0
        %475 = vmatprep.subr.bf16.mxu0 0
        %476 = vmatpush1.bf16.msra.mxu0 0
        %477 = vmatprep.subr.bf16.mxu0 0
        %478 = vmatpush1.bf16.msra.mxu0 0
        %479 = vmatprep.mubr.bf16.mxu0 0
        %480 = vmatmul.mubr.bf16.gmra.mrb[0].mxu0 %v400
        %v481 = vpop.f32.mrb[0].mxu0
        %v482 = vadd.f32 %v386, %v481
        %v483 = vpop.f32.mrb[0].mxu0
        %v484 = vadd.f32 %v390, %v483
        %v485 = vpop.f32.mrb[0].mxu0
        %v486 = vadd.f32 %v386, %v485
        %v487 = vpop.f32.mrb[0].mxu0
        %v488 = vadd.f32 %v390, %v487
        %489 = vmatprep.mubr.bf16.mxu0 0
        %490 = vmatmul.mubr.bf16.gmra.mrb[0].mxu0 %v403
        %v491 = vpop.f32.mrb[0].mxu0
        %v492 = vadd.f32 %v386, %v491
        %v493 = vpop.f32.mrb[0].mxu0
        %v494 = vadd.f32 %v390, %v493
        %v495 = vpop.f32.mrb[0].mxu0
        %v496 = vadd.f32 %v386, %v495
        %v497 = vpop.f32.mrb[0].mxu0
        %v498 = vadd.f32 %v390, %v497
        %499 = vmatprep.mubr.bf16.mxu0 0
        %500 = vmatmul.mubr.bf16.gmra.mrb[0].mxu0 %v406
        %v501 = vpop.f32.mrb[0].mxu0
        %v502 = vadd.f32 %v386, %v501
        %v503 = vpop.f32.mrb[0].mxu0
        %v504 = vadd.f32 %v390, %v503
        %v505 = vpop.f32.mrb[0].mxu0
        %v506 = vadd.f32 %v386, %v505
        %v507 = vpop.f32.mrb[0].mxu0
        %v508 = vadd.f32 %v390, %v507
        %509 = vmatprep.mubr.bf16.mxu0 0
        %510 = vmatmul.mubr.bf16.gmra.mrb[0].mxu0 %v409
        %v511 = vpop.f32.mrb[0].mxu0
        %v512 = vadd.f32 %v386, %v511
        %v513 = vpop.f32.mrb[0].mxu0
        %v514 = vadd.f32 %v390, %v513
        %v515 = vpop.f32.mrb[0].mxu0
        %v516 = vadd.f32 %v386, %v515
        %v517 = vpop.f32.mrb[0].mxu0
        %v518 = vadd.f32 %v390, %v517
        %519 = vmatprep.mubr.bf16.mxu0 0
        %520 = vmatmul.mubr.bf16.gmra.mrb[0].mxu0 %v412
        %v521 = vpop.f32.mrb[0].mxu0
        %v522 = vadd.f32 %v386, %v521
        %v523 = vpop.f32.mrb[0].mxu0
        %v524 = vadd.f32 %v390, %v523
        %v525 = vpop.f32.mrb[0].mxu0
        %v526 = vadd.f32 %v386, %v525
        %v527 = vpop.f32.mrb[0].mxu0
        %v528 = vadd.f32 %v390, %v527
        %529 = vmatprep.mubr.bf16.mxu0 0
        %530 = vmatmul.mubr.bf16.gmra.mrb[0].mxu0 %v415
        %v531 = vpop.f32.mrb[0].mxu0
        %v532 = vadd.f32 %v386, %v531
        %v533 = vpop.f32.mrb[0].mxu0
        %v534 = vadd.f32 %v390, %v533
        %v535 = vpop.f32.mrb[0].mxu0
        %v536 = vadd.f32 %v386, %v535
        %v537 = vpop.f32.mrb[0].mxu0
        %v538 = vadd.f32 %v390, %v537
        %539 = vmatprep.mubr.bf16.mxu0 0
        %540 = vmatmul.mubr.bf16.gmra.mrb[0].mxu0 %v418
        %v541 = vpop.f32.mrb[0].mxu0
        %v542 = vadd.f32 %v386, %v541
        %v543 = vpop.f32.mrb[0].mxu0
        %v544 = vadd.f32 %v390, %v543
        %v545 = vpop.f32.mrb[0].mxu0
        %v546 = vadd.f32 %v386, %v545
        %v547 = vpop.f32.mrb[0].mxu0
        %v548 = vadd.f32 %v390, %v547
        %549 = vmatprep.mubr.bf16.mxu0 0
        %550 = vmatmul.mubr.bf16.gmra.mrb[0].mxu0 %v421
        %v551 = vpop.f32.mrb[0].mxu0
        %v552 = vadd.f32 %v386, %v551
        %v553 = vpop.f32.mrb[0].mxu0
        %v554 = vadd.f32 %v390, %v553
        %v555 = vpop.f32.mrb[0].mxu0
        %v556 = vadd.f32 %v386, %v555
        %v557 = vpop.f32.mrb[0].mxu0
        %v558 = vadd.f32 %v390, %v557
        %559 = vmatprep.mubr.bf16.mxu0 0
        %560 = vmatmul.mubr.bf16.gmra.mrb[0].mxu0 %v424
        %v561 = vpop.f32.mrb[0].mxu0
        %v562 = vadd.f32 %v386, %v561
        %v563 = vpop.f32.mrb[0].mxu0
        %v564 = vadd.f32 %v390, %v563
        %v565 = vpop.f32.mrb[0].mxu0
        %v566 = vadd.f32 %v386, %v565
        %v567 = vpop.f32.mrb[0].mxu0
        %v568 = vadd.f32 %v390, %v567
        %569 = vmatprep.mubr.bf16.mxu0 0
        %570 = vmatmul.mubr.bf16.gmra.mrb[0].mxu0 %v427
        %v571 = vpop.f32.mrb[0].mxu0
        %v572 = vadd.f32 %v386, %v571
        %v573 = vpop.f32.mrb[0].mxu0
        %v574 = vadd.f32 %v390, %v573
        %v575 = vpop.f32.mrb[0].mxu0
        %v576 = vadd.f32 %v386, %v575
        %v577 = vpop.f32.mrb[0].mxu0
        %v578 = vadd.f32 %v390, %v577
        %579 = vmatprep.mubr.bf16.mxu0 0
        %580 = vmatmul.mubr.bf16.gmra.mrb[0].mxu0 %v430
        %v581 = vpop.f32.mrb[0].mxu0
        %v582 = vadd.f32 %v386, %v581
        %v583 = vpop.f32.mrb[0].mxu0
        %v584 = vadd.f32 %v390, %v583
        %v585 = vpop.f32.mrb[0].mxu0
        %v586 = vadd.f32 %v386, %v585
        %v587 = vpop.f32.mrb[0].mxu0
        %v588 = vadd.f32 %v390, %v587
        %589 = vmatprep.mubr.bf16.mxu0 0
        %590 = vmatmul.mubr.bf16.gmra.mrb[0].mxu0 %v433
        %v591 = vpop.f32.mrb[0].mxu0
        %v592 = vadd.f32 %v386, %v591
        %v593 = vpop.f32.mrb[0].mxu0
        %v594 = vadd.f32 %v390, %v593
        %v595 = vpop.f32.mrb[0].mxu0
        %v596 = vadd.f32 %v386, %v595
        %v597 = vpop.f32.mrb[0].mxu0
        %v598 = vadd.f32 %v390, %v597
        %599 = vmatprep.mubr.bf16.mxu0 0
        %600 = vmatmul.mubr.bf16.gmra.mrb[0].mxu0 %v436
        %v601 = vpop.f32.mrb[0].mxu0
        %v602 = vadd.f32 %v386, %v601
        %v603 = vpop.f32.mrb[0].mxu0
        %v604 = vadd.f32 %v390, %v603
        %v605 = vpop.f32.mrb[0].mxu0
        %v606 = vadd.f32 %v386, %v605
        %v607 = vpop.f32.mrb[0].mxu0
        %v608 = vadd.f32 %v390, %v607
        %609 = vmatprep.mubr.bf16.mxu0 0
        %610 = vmatmul.mubr.bf16.gmra.mrb[0].mxu0 %v439
        %v611 = vpop.f32.mrb[0].mxu0
        %v612 = vadd.f32 %v386, %v611
        %v613 = vpop.f32.mrb[0].mxu0
        %v614 = vadd.f32 %v390, %v613
        %v615 = vpop.f32.mrb[0].mxu0
        %v616 = vadd.f32 %v386, %v615
        %v617 = vpop.f32.mrb[0].mxu0
        %v618 = vadd.f32 %v390, %v617
        %619 = vmatprep.mubr.bf16.mxu0 0
        %620 = vmatmul.mubr.bf16.gmra.mrb[0].mxu0 %v442
        %v621 = vpop.f32.mrb[0].mxu0
        %v622 = vadd.f32 %v386, %v621
        %v623 = vpop.f32.mrb[0].mxu0
        %v624 = vadd.f32 %v390, %v623
        %v625 = vpop.f32.mrb[0].mxu0
        %v626 = vadd.f32 %v386, %v625
        %v627 = vpop.f32.mrb[0].mxu0
        %v628 = vadd.f32 %v390, %v627
        %629 = vmatprep.mubr.bf16.mxu0 0
        %630 = vmatmul.mubr.bf16.gmra.mrb[0].mxu0 %v445
        %v631 = vpop.f32.mrb[0].mxu0
        %v632 = vadd.f32 %v386, %v631
        %v633 = vpop.f32.mrb[0].mxu0
        %v634 = vadd.f32 %v390, %v633
        %v635 = vpop.f32.mrb[0].mxu0
        %v636 = vadd.f32 %v386, %v635
        %v637 = vpop.f32.mrb[0].mxu0
        %v638 = vadd.f32 %v390, %v637
        %639 = vdwg.mxu0
        %640 = vmatprep.subr.bf16.mxu0 0
        %641 = vmatpush1.bf16.msra.mxu0 %v377
        %642 = vmatprep.subr.bf16.mxu0 0
        %643 = vmatpush1.bf16.msra.mxu0 %v380
        %644 = vmatprep.subr.bf16.mxu0 0
        %645 = vmatpush1.bf16.msra.mxu0 0
        %646 = vmatprep.subr.bf16.mxu0 0
        %647 = vmatpush1.bf16.msra.mxu0 0
        %648 = vmatprep.subr.bf16.mxu0 0
        %649 = vmatpush1.bf16.msra.mxu0 0
        %650 = vmatprep.subr.bf16.mxu0 0
        %651 = vmatpush1.bf16.msra.mxu0 0
        %652 = vmatprep.subr.bf16.mxu0 0
        %653 = vmatpush1.bf16.msra.mxu0 0
        %654 = vmatprep.subr.bf16.mxu0 0
        %655 = vmatpush1.bf16.msra.mxu0 0
        %656 = vmatprep.subr.bf16.mxu0 0
        %657 = vmatpush1.bf16.msra.mxu0 0
        %658 = vmatprep.subr.bf16.mxu0 0
        %659 = vmatpush1.bf16.msra.mxu0 0
        %660 = vmatprep.subr.bf16.mxu0 0
        %661 = vmatpush1.bf16.msra.mxu0 0
        %662 = vmatprep.subr.bf16.mxu0 0
        %663 = vmatpush1.bf16.msra.mxu0 0
        %664 = vmatprep.subr.bf16.mxu0 0
        %665 = vmatpush1.bf16.msra.mxu0 0
        %666 = vmatprep.subr.bf16.mxu0 0
        %667 = vmatpush1.bf16.msra.mxu0 0
        %668 = vmatprep.subr.bf16.mxu0 0
        %669 = vmatpush1.bf16.msra.mxu0 0
        %670 = vmatprep.subr.bf16.mxu0 0
        %671 = vmatpush1.bf16.msra.mxu0 0
        %672 = vmatprep.mubr.bf16.mxu0 0
        %673 = vmatmul.mubr.bf16.gmra.mrb[0].mxu0 %v400
        %v674 = vpop.f32.mrb[0].mxu0
        %v675 = vadd.f32 %v394, %v674
        %v676 = vpop.f32.mrb[0].mxu0
        %v677 = vpop.f32.mrb[0].mxu0
        %v678 = vadd.f32 %v394, %v677
        %v679 = vpop.f32.mrb[0].mxu0
        %680 = vmatprep.mubr.bf16.mxu0 0
        %681 = vmatmul.mubr.bf16.gmra.mrb[0].mxu0 %v403
        %v682 = vpop.f32.mrb[0].mxu0
        %v683 = vadd.f32 %v394, %v682
        %v684 = vpop.f32.mrb[0].mxu0
        %v685 = vpop.f32.mrb[0].mxu0
        %v686 = vadd.f32 %v394, %v685
        %v687 = vpop.f32.mrb[0].mxu0
        %688 = vmatprep.mubr.bf16.mxu0 0
        %689 = vmatmul.mubr.bf16.gmra.mrb[0].mxu0 %v406
        %v690 = vpop.f32.mrb[0].mxu0
        %v691 = vadd.f32 %v394, %v690
        %v692 = vpop.f32.mrb[0].mxu0
        %v693 = vpop.f32.mrb[0].mxu0
        %v694 = vadd.f32 %v394, %v693
        %v695 = vpop.f32.mrb[0].mxu0
        %696 = vmatprep.mubr.bf16.mxu0 0
        %697 = vmatmul.mubr.bf16.gmra.mrb[0].mxu0 %v409
        %v698 = vpop.f32.mrb[0].mxu0
        %v699 = vadd.f32 %v394, %v698
        %v700 = vpop.f32.mrb[0].mxu0
        %v701 = vpop.f32.mrb[0].mxu0
        %v702 = vadd.f32 %v394, %v701
        %v703 = vpop.f32.mrb[0].mxu0
        %704 = vmatprep.mubr.bf16.mxu0 0
        %705 = vmatmul.mubr.bf16.gmra.mrb[0].mxu0 %v412
        %v706 = vpop.f32.mrb[0].mxu0
        %v707 = vadd.f32 %v394, %v706
        %v708 = vpop.f32.mrb[0].mxu0
        %v709 = vpop.f32.mrb[0].mxu0
        %v710 = vadd.f32 %v394, %v709
        %v711 = vpop.f32.mrb[0].mxu0
        %712 = vmatprep.mubr.bf16.mxu0 0
        %713 = vmatmul.mubr.bf16.gmra.mrb[0].mxu0 %v415
        %v714 = vpop.f32.mrb[0].mxu0
        %v715 = vadd.f32 %v394, %v714
        %v716 = vpop.f32.mrb[0].mxu0
        %v717 = vpop.f32.mrb[0].mxu0
        %v718 = vadd.f32 %v394, %v717
        %v719 = vpop.f32.mrb[0].mxu0
        %720 = vmatprep.mubr.bf16.mxu0 0
        %721 = vmatmul.mubr.bf16.gmra.mrb[0].mxu0 %v418
        %v722 = vpop.f32.mrb[0].mxu0
        %v723 = vadd.f32 %v394, %v722
        %v724 = vpop.f32.mrb[0].mxu0
        %v725 = vpop.f32.mrb[0].mxu0
        %v726 = vadd.f32 %v394, %v725
        %v727 = vpop.f32.mrb[0].mxu0
        %728 = vmatprep.mubr.bf16.mxu0 0
        %729 = vmatmul.mubr.bf16.gmra.mrb[0].mxu0 %v421
        %v730 = vpop.f32.mrb[0].mxu0
        %v731 = vadd.f32 %v394, %v730
        %v732 = vpop.f32.mrb[0].mxu0
        %v733 = vpop.f32.mrb[0].mxu0
        %v734 = vadd.f32 %v394, %v733
        %v735 = vpop.f32.mrb[0].mxu0
        %736 = vmatprep.mubr.bf16.mxu0 0
        %737 = vmatmul.mubr.bf16.gmra.mrb[0].mxu0 %v424
        %v738 = vpop.f32.mrb[0].mxu0
        %v739 = vadd.f32 %v394, %v738
        %v740 = vpop.f32.mrb[0].mxu0
        %v741 = vpop.f32.mrb[0].mxu0
        %v742 = vadd.f32 %v394, %v741
        %v743 = vpop.f32.mrb[0].mxu0
        %744 = vmatprep.mubr.bf16.mxu0 0
        %745 = vmatmul.mubr.bf16.gmra.mrb[0].mxu0 %v427
        %v746 = vpop.f32.mrb[0].mxu0
        %v747 = vadd.f32 %v394, %v746
        %v748 = vpop.f32.mrb[0].mxu0
        %v749 = vpop.f32.mrb[0].mxu0
        %v750 = vadd.f32 %v394, %v749
        %v751 = vpop.f32.mrb[0].mxu0
        %752 = vmatprep.mubr.bf16.mxu0 0
        %753 = vmatmul.mubr.bf16.gmra.mrb[0].mxu0 %v430
        %v754 = vpop.f32.mrb[0].mxu0
        %v755 = vadd.f32 %v394, %v754
        %v756 = vpop.f32.mrb[0].mxu0
        %v757 = vpop.f32.mrb[0].mxu0
        %v758 = vadd.f32 %v394, %v757
        %v759 = vpop.f32.mrb[0].mxu0
        %760 = vmatprep.mubr.bf16.mxu0 0
        %761 = vmatmul.mubr.bf16.gmra.mrb[0].mxu0 %v433
        %v762 = vpop.f32.mrb[0].mxu0
        %v763 = vadd.f32 %v394, %v762
        %v764 = vpop.f32.mrb[0].mxu0
        %v765 = vpop.f32.mrb[0].mxu0
        %v766 = vadd.f32 %v394, %v765
        %v767 = vpop.f32.mrb[0].mxu0
        %768 = vmatprep.mubr.bf16.mxu0 0
        %769 = vmatmul.mubr.bf16.gmra.mrb[0].mxu0 %v436
        %v770 = vpop.f32.mrb[0].mxu0
        %v771 = vadd.f32 %v394, %v770
        %v772 = vpop.f32.mrb[0].mxu0
        %v773 = vpop.f32.mrb[0].mxu0
        %v774 = vadd.f32 %v394, %v773
        %v775 = vpop.f32.mrb[0].mxu0
        %776 = vmatprep.mubr.bf16.mxu0 0
        %777 = vmatmul.mubr.bf16.gmra.mrb[0].mxu0 %v439
        %v778 = vpop.f32.mrb[0].mxu0
        %v779 = vadd.f32 %v394, %v778
        %v780 = vpop.f32.mrb[0].mxu0
        %v781 = vpop.f32.mrb[0].mxu0
        %v782 = vadd.f32 %v394, %v781
        %v783 = vpop.f32.mrb[0].mxu0
        %784 = vmatprep.mubr.bf16.mxu0 0
        %785 = vmatmul.mubr.bf16.gmra.mrb[0].mxu0 %v442
        %v786 = vpop.f32.mrb[0].mxu0
        %v787 = vadd.f32 %v394, %v786
        %v788 = vpop.f32.mrb[0].mxu0
        %v789 = vpop.f32.mrb[0].mxu0
        %v790 = vadd.f32 %v394, %v789
        %v791 = vpop.f32.mrb[0].mxu0
        %792 = vmatprep.mubr.bf16.mxu0 0
        %793 = vmatmul.mubr.bf16.gmra.mrb[0].mxu0 %v445
        %v794 = vpop.f32.mrb[0].mxu0
        %v795 = vadd.f32 %v394, %v794
        %v796 = vpop.f32.mrb[0].mxu0
        %v797 = vpop.f32.mrb[0].mxu0
        %v798 = vadd.f32 %v394, %v797
        %v799 = vpop.f32.mrb[0].mxu0
        %800 = vdwg.mxu0
        %v801 = vpack.c.bf16 %v486, %v482
        %v802 = vpack.c.bf16 %v496, %v492
        %v803 = vpack.c.bf16 %v506, %v502
        %v804 = vpack.c.bf16 %v516, %v512
        %v805 = vpack.c.bf16 %v526, %v522
        %v806 = vpack.c.bf16 %v536, %v532
        %v807 = vpack.c.bf16 %v546, %v542
        %v808 = vpack.c.bf16 %v556, %v552
        %v809 = vpack.c.bf16 %v566, %v562
        %v810 = vpack.c.bf16 %v576, %v572
        %v811 = vpack.c.bf16 %v586, %v582
        %v812 = vpack.c.bf16 %v596, %v592
        %v813 = vpack.c.bf16 %v606, %v602
        %v814 = vpack.c.bf16 %v616, %v612
        %v815 = vpack.c.bf16 %v626, %v622
        %v816 = vpack.c.bf16 %v636, %v632
        %v817 = vpack.c.bf16 %v488, %v484
        %v818 = vpack.c.bf16 %v498, %v494
        %v819 = vpack.c.bf16 %v508, %v504
        %v820 = vpack.c.bf16 %v518, %v514
        %v821 = vpack.c.bf16 %v528, %v524
        %v822 = vpack.c.bf16 %v538, %v534
        %v823 = vpack.c.bf16 %v548, %v544
        %v824 = vpack.c.bf16 %v558, %v554
        %v825 = vpack.c.bf16 %v568, %v564
        %v826 = vpack.c.bf16 %v578, %v574
        %v827 = vpack.c.bf16 %v588, %v584
        %v828 = vpack.c.bf16 %v598, %v594
        %v829 = vpack.c.bf16 %v608, %v604
        %v830 = vpack.c.bf16 %v618, %v614
        %v831 = vpack.c.bf16 %v628, %v624
        %v832 = vpack.c.bf16 %v638, %v634
        %v833 = vpack.c.bf16 %v678, %v675
        %v834 = vpack.c.bf16 %v686, %v683
        %v835 = vpack.c.bf16 %v694, %v691
        %v836 = vpack.c.bf16 %v702, %v699
        %v837 = vpack.c.bf16 %v710, %v707
        %v838 = vpack.c.bf16 %v718, %v715
        %v839 = vpack.c.bf16 %v726, %v723
        %v840 = vpack.c.bf16 %v734, %v731
        %v841 = vpack.c.bf16 %v742, %v739
        %v842 = vpack.c.bf16 %v750, %v747
        %v843 = vpack.c.bf16 %v758, %v755
        %v844 = vpack.c.bf16 %v766, %v763
        %v845 = vpack.c.bf16 %v774, %v771
        %v846 = vpack.c.bf16 %v782, %v779
        %v847 = vpack.c.bf16 %v790, %v787
        %v848 = vpack.c.bf16 %v798, %v795
        %849 = vmatprep.subr.bf16.mxu0 0
        %850 = vmatpush1.bf16.xpose.msra.mxu0 %v817
        %851 = vmatprep.subr.bf16.mxu0 0
        %852 = vmatpush1.bf16.xpose.msra.mxu0 %v818
        %853 = vmatprep.subr.bf16.mxu0 0
        %854 = vmatpush1.bf16.xpose.msra.mxu0 %v819
        %855 = vmatprep.subr.bf16.mxu0 0
        %856 = vmatpush1.bf16.xpose.msra.mxu0 %v820
        %857 = vmatprep.subr.bf16.mxu0 0
        %858 = vmatpush1.bf16.xpose.msra.mxu0 %v821
        %859 = vmatprep.subr.bf16.mxu0 0
        %860 = vmatpush1.bf16.xpose.msra.mxu0 %v822
        %861 = vmatprep.subr.bf16.mxu0 0
        %862 = vmatpush1.bf16.xpose.msra.mxu0 %v823
        %863 = vmatprep.subr.bf16.mxu0 0
        %864 = vmatpush1.bf16.xpose.msra.mxu0 %v824
        %865 = vmatprep.subr.bf16.mxu0 0
        %866 = vmatpush1.bf16.xpose.msra.mxu0 %v825
        %867 = vmatprep.subr.bf16.mxu0 0
        %868 = vmatpush1.bf16.xpose.msra.mxu0 %v826
        %869 = vmatprep.subr.bf16.mxu0 0
        %870 = vmatpush1.bf16.xpose.msra.mxu0 %v827
        %871 = vmatprep.subr.bf16.mxu0 0
        %872 = vmatpush1.bf16.xpose.msra.mxu0 %v828
        %873 = vmatprep.subr.bf16.mxu0 0
        %874 = vmatpush1.bf16.xpose.msra.mxu0 %v829
        %875 = vmatprep.subr.bf16.mxu0 0
        %876 = vmatpush1.bf16.xpose.msra.mxu0 %v830
        %877 = vmatprep.subr.bf16.mxu0 0
        %878 = vmatpush1.bf16.xpose.msra.mxu0 %v831
        %879 = vmatprep.subr.bf16.mxu0 0
        %880 = vmatpush1.bf16.xpose.msra.mxu0 %v832
        %881 = vmatprep.mubr.bf16.mxu0 0
        %882 = vmatmul.mubr.bf16.gmra.mrb[0].mxu0 %v801
        %v883 = vpop.f32.mrb[0].mxu0
        %v884 = vadd.f32 0.0, %v883
        %v885 = vpop.f32.mrb[0].mxu0
        %v886 = vadd.f32 0.0, %v885
        %v887 = vpop.f32.mrb[0].mxu0
        %v888 = vadd.f32 0.0, %v887
        %v889 = vpop.f32.mrb[0].mxu0
        %v890 = vadd.f32 0.0, %v889
        %891 = vmatprep.mubr.bf16.mxu0 0
        %892 = vmatmul.mubr.bf16.gmra.mrb[0].mxu0 %v802
        %v893 = vpop.f32.mrb[0].mxu0
        %v894 = vadd.f32 0.0, %v893
        %v895 = vpop.f32.mrb[0].mxu0
        %v896 = vadd.f32 0.0, %v895
        %v897 = vpop.f32.mrb[0].mxu0
        %v898 = vadd.f32 0.0, %v897
        %v899 = vpop.f32.mrb[0].mxu0
        %v900 = vadd.f32 0.0, %v899
        %901 = vmatprep.mubr.bf16.mxu0 0
        %902 = vmatmul.mubr.bf16.gmra.mrb[0].mxu0 %v803
        %v903 = vpop.f32.mrb[0].mxu0
        %v904 = vadd.f32 0.0, %v903
        %v905 = vpop.f32.mrb[0].mxu0
        %v906 = vadd.f32 0.0, %v905
        %v907 = vpop.f32.mrb[0].mxu0
        %v908 = vadd.f32 0.0, %v907
        %v909 = vpop.f32.mrb[0].mxu0
        %v910 = vadd.f32 0.0, %v909
        %911 = vmatprep.mubr.bf16.mxu0 0
        %912 = vmatmul.mubr.bf16.gmra.mrb[0].mxu0 %v804
        %v913 = vpop.f32.mrb[0].mxu0
        %v914 = vadd.f32 0.0, %v913
        %v915 = vpop.f32.mrb[0].mxu0
        %v916 = vadd.f32 0.0, %v915
        %v917 = vpop.f32.mrb[0].mxu0
        %v918 = vadd.f32 0.0, %v917
        %v919 = vpop.f32.mrb[0].mxu0
        %v920 = vadd.f32 0.0, %v919
        %921 = vmatprep.mubr.bf16.mxu0 0
        %922 = vmatmul.mubr.bf16.gmra.mrb[0].mxu0 %v805
        %v923 = vpop.f32.mrb[0].mxu0
        %v924 = vadd.f32 0.0, %v923
        %v925 = vpop.f32.mrb[0].mxu0
        %v926 = vadd.f32 0.0, %v925
        %v927 = vpop.f32.mrb[0].mxu0
        %v928 = vadd.f32 0.0, %v927
        %v929 = vpop.f32.mrb[0].mxu0
        %v930 = vadd.f32 0.0, %v929
        %931 = vmatprep.mubr.bf16.mxu0 0
        %932 = vmatmul.mubr.bf16.gmra.mrb[0].mxu0 %v806
        %v933 = vpop.f32.mrb[0].mxu0
        %v934 = vadd.f32 0.0, %v933
        %v935 = vpop.f32.mrb[0].mxu0
        %v936 = vadd.f32 0.0, %v935
        %v937 = vpop.f32.mrb[0].mxu0
        %v938 = vadd.f32 0.0, %v937
        %v939 = vpop.f32.mrb[0].mxu0
        %v940 = vadd.f32 0.0, %v939
        %941 = vmatprep.mubr.bf16.mxu0 0
        %942 = vmatmul.mubr.bf16.gmra.mrb[0].mxu0 %v807
        %v943 = vpop.f32.mrb[0].mxu0
        %v944 = vadd.f32 0.0, %v943
        %v945 = vpop.f32.mrb[0].mxu0
        %v946 = vadd.f32 0.0, %v945
        %v947 = vpop.f32.mrb[0].mxu0
        %v948 = vadd.f32 0.0, %v947
        %v949 = vpop.f32.mrb[0].mxu0
        %v950 = vadd.f32 0.0, %v949
        %951 = vmatprep.mubr.bf16.mxu0 0
        %952 = vmatmul.mubr.bf16.gmra.mrb[0].mxu0 %v808
        %v953 = vpop.f32.mrb[0].mxu0
        %v954 = vadd.f32 0.0, %v953
        %v955 = vpop.f32.mrb[0].mxu0
        %v956 = vadd.f32 0.0, %v955
        %v957 = vpop.f32.mrb[0].mxu0
        %v958 = vadd.f32 0.0, %v957
        %v959 = vpop.f32.mrb[0].mxu0
        %v960 = vadd.f32 0.0, %v959
        %961 = vmatprep.mubr.bf16.mxu0 0
        %962 = vmatmul.mubr.bf16.gmra.mrb[0].mxu0 %v809
        %v963 = vpop.f32.mrb[0].mxu0
        %v964 = vadd.f32 0.0, %v963
        %v965 = vpop.f32.mrb[0].mxu0
        %v966 = vadd.f32 0.0, %v965
        %v967 = vpop.f32.mrb[0].mxu0
        %v968 = vadd.f32 0.0, %v967
        %v969 = vpop.f32.mrb[0].mxu0
        %v970 = vadd.f32 0.0, %v969
        %971 = vmatprep.mubr.bf16.mxu0 0
        %972 = vmatmul.mubr.bf16.gmra.mrb[0].mxu0 %v810
        %v973 = vpop.f32.mrb[0].mxu0
        %v974 = vadd.f32 0.0, %v973
        %v975 = vpop.f32.mrb[0].mxu0
        %v976 = vadd.f32 0.0, %v975
        %v977 = vpop.f32.mrb[0].mxu0
        %v978 = vadd.f32 0.0, %v977
        %v979 = vpop.f32.mrb[0].mxu0
        %v980 = vadd.f32 0.0, %v979
        %981 = vmatprep.mubr.bf16.mxu0 0
        %982 = vmatmul.mubr.bf16.gmra.mrb[0].mxu0 %v811
        %v983 = vpop.f32.mrb[0].mxu0
        %v984 = vadd.f32 0.0, %v983
        %v985 = vpop.f32.mrb[0].mxu0
        %v986 = vadd.f32 0.0, %v985
        %v987 = vpop.f32.mrb[0].mxu0
        %v988 = vadd.f32 0.0, %v987
        %v989 = vpop.f32.mrb[0].mxu0
        %v990 = vadd.f32 0.0, %v989
        %991 = vmatprep.mubr.bf16.mxu0 0
        %992 = vmatmul.mubr.bf16.gmra.mrb[0].mxu0 %v812
        %v993 = vpop.f32.mrb[0].mxu0
        %v994 = vadd.f32 0.0, %v993
        %v995 = vpop.f32.mrb[0].mxu0
        %v996 = vadd.f32 0.0, %v995
        %v997 = vpop.f32.mrb[0].mxu0
        %v998 = vadd.f32 0.0, %v997
        %v999 = vpop.f32.mrb[0].mxu0
        %v1000 = vadd.f32 0.0, %v999
        %1001 = vmatprep.mubr.bf16.mxu0 0
        %1002 = vmatmul.mubr.bf16.gmra.mrb[0].mxu0 %v813
        %v1003 = vpop.f32.mrb[0].mxu0
        %v1004 = vadd.f32 0.0, %v1003
        %v1005 = vpop.f32.mrb[0].mxu0
        %v1006 = vadd.f32 0.0, %v1005
        %v1007 = vpop.f32.mrb[0].mxu0
        %v1008 = vadd.f32 0.0, %v1007
        %v1009 = vpop.f32.mrb[0].mxu0
        %v1010 = vadd.f32 0.0, %v1009
        %1011 = vmatprep.mubr.bf16.mxu0 0
        %1012 = vmatmul.mubr.bf16.gmra.mrb[0].mxu0 %v814
        %v1013 = vpop.f32.mrb[0].mxu0
        %v1014 = vadd.f32 0.0, %v1013
        %v1015 = vpop.f32.mrb[0].mxu0
        %v1016 = vadd.f32 0.0, %v1015
        %v1017 = vpop.f32.mrb[0].mxu0
        %v1018 = vadd.f32 0.0, %v1017
        %v1019 = vpop.f32.mrb[0].mxu0
        %v1020 = vadd.f32 0.0, %v1019
        %1021 = vmatprep.mubr.bf16.mxu0 0
        %1022 = vmatmul.mubr.bf16.gmra.mrb[0].mxu0 %v815
        %v1023 = vpop.f32.mrb[0].mxu0
        %v1024 = vadd.f32 0.0, %v1023
        %v1025 = vpop.f32.mrb[0].mxu0
        %v1026 = vadd.f32 0.0, %v1025
        %v1027 = vpop.f32.mrb[0].mxu0
        %v1028 = vadd.f32 0.0, %v1027
        %v1029 = vpop.f32.mrb[0].mxu0
        %v1030 = vadd.f32 0.0, %v1029
        %1031 = vmatprep.mubr.bf16.mxu0 0
        %1032 = vmatmul.mubr.bf16.gmra.mrb[0].mxu0 %v816
        %v1033 = vpop.f32.mrb[0].mxu0
        %v1034 = vadd.f32 0.0, %v1033
        %v1035 = vpop.f32.mrb[0].mxu0
        %v1036 = vadd.f32 0.0, %v1035
        %v1037 = vpop.f32.mrb[0].mxu0
        %v1038 = vadd.f32 0.0, %v1037
        %v1039 = vpop.f32.mrb[0].mxu0
        %v1040 = vadd.f32 0.0, %v1039
        %1041 = vdwg.mxu0
        %v1042 = vmul.f32 %v884, 0.17677669
        %v1043 = vmul.f32 %v886, 0.17677669
        %v1044 = vmul.f32 %v888, 0.17677669
        %v1045 = vmul.f32 %v890, 0.17677669
        %v1046 = vmul.f32 %v894, 0.17677669
        %v1047 = vmul.f32 %v896, 0.17677669
        %v1048 = vmul.f32 %v898, 0.17677669
        %v1049 = vmul.f32 %v900, 0.17677669
        %v1050 = vmul.f32 %v904, 0.17677669
        %v1051 = vmul.f32 %v906, 0.17677669
        %v1052 = vmul.f32 %v908, 0.17677669
        %v1053 = vmul.f32 %v910, 0.17677669
        %v1054 = vmul.f32 %v914, 0.17677669
        %v1055 = vmul.f32 %v916, 0.17677669
        %v1056 = vmul.f32 %v918, 0.17677669
        %v1057 = vmul.f32 %v920, 0.17677669
        %v1058 = vmul.f32 %v924, 0.17677669
        %v1059 = vmul.f32 %v926, 0.17677669
        %v1060 = vmul.f32 %v928, 0.17677669
        %v1061 = vmul.f32 %v930, 0.17677669
        %v1062 = vmul.f32 %v934, 0.17677669
        %v1063 = vmul.f32 %v936, 0.17677669
        %v1064 = vmul.f32 %v938, 0.17677669
        %v1065 = vmul.f32 %v940, 0.17677669
        %v1066 = vmul.f32 %v944, 0.17677669
        %v1067 = vmul.f32 %v946, 0.17677669
        %v1068 = vmul.f32 %v948, 0.17677669
        %v1069 = vmul.f32 %v950, 0.17677669
        %v1070 = vmul.f32 %v954, 0.17677669
        %v1071 = vmul.f32 %v956, 0.17677669
        %v1072 = vmul.f32 %v958, 0.17677669
        %v1073 = vmul.f32 %v960, 0.17677669
        %v1074 = vmul.f32 %v964, 0.17677669
        %v1075 = vmul.f32 %v966, 0.17677669
        %v1076 = vmul.f32 %v968, 0.17677669
        %v1077 = vmul.f32 %v970, 0.17677669
        %v1078 = vmul.f32 %v974, 0.17677669
        %v1079 = vmul.f32 %v976, 0.17677669
        %v1080 = vmul.f32 %v978, 0.17677669
        %v1081 = vmul.f32 %v980, 0.17677669
        %v1082 = vmul.f32 %v984, 0.17677669
        %v1083 = vmul.f32 %v986, 0.17677669
        %v1084 = vmul.f32 %v988, 0.17677669
        %v1085 = vmul.f32 %v990, 0.17677669
        %v1086 = vmul.f32 %v994, 0.17677669
        %v1087 = vmul.f32 %v996, 0.17677669
        %v1088 = vmul.f32 %v998, 0.17677669
        %v1089 = vmul.f32 %v1000, 0.17677669
        %v1090 = vmul.f32 %v1004, 0.17677669
        %v1091 = vmul.f32 %v1006, 0.17677669
        %v1092 = vmul.f32 %v1008, 0.17677669
        %v1093 = vmul.f32 %v1010, 0.17677669
        %v1094 = vmul.f32 %v1014, 0.17677669
        %v1095 = vmul.f32 %v1016, 0.17677669
        %v1096 = vmul.f32 %v1018, 0.17677669
        %v1097 = vmul.f32 %v1020, 0.17677669
        %v1098 = vmul.f32 %v1024, 0.17677669
        %v1099 = vmul.f32 %v1026, 0.17677669
        %v1100 = vmul.f32 %v1028, 0.17677669
        %v1101 = vmul.f32 %v1030, 0.17677669
        %v1102 = vmul.f32 %v1034, 0.17677669
        %v1103 = vmul.f32 %v1036, 0.17677669
        %v1104 = vmul.f32 %v1038, 0.17677669
        %v1105 = vmul.f32 %v1040, 0.17677669
        %v1106 = vld [vmem:[%s301] sm:$0xff]
        %v1107 = vld [vmem:[%s301 + $0x8] sm:$0xff]
        %v1108 = vld [vmem:[%s301 + $0x10] sm:$0xff]
        %v1109 = vld [vmem:[%s301 + $0x18] sm:$0xff]
        %v1110 = vld [vmem:[%s301 + $0x20] sm:$0xff]
        %v1111 = vld [vmem:[%s301 + $0x28] sm:$0xff]
        %v1112 = vld [vmem:[%s301 + $0x30] sm:$0xff]
        %v1113 = vld [vmem:[%s301 + $0x38] sm:$0xff]
        %v1114 = vld [vmem:[%s301 + $0x40] sm:$0xff]
        %v1115 = vld [vmem:[%s301 + $0x48] sm:$0xff]
        %v1116 = vld [vmem:[%s301 + $0x50] sm:$0xff]
        %v1117 = vld [vmem:[%s301 + $0x58] sm:$0xff]
        %v1118 = vld [vmem:[%s301 + $0x60] sm:$0xff]
        %v1119 = vld [vmem:[%s301 + $0x68] sm:$0xff]
        %v1120 = vld [vmem:[%s301 + $0x70] sm:$0xff]
        %v1121 = vld [vmem:[%s301 + $0x78] sm:$0xff]
        %v1122 = vld [vmem:[%s301 + $0x80] sm:$0xff]
        %v1123 = vld [vmem:[%s301 + $0x88] sm:$0xff]
        %v1124 = vld [vmem:[%s301 + $0x90] sm:$0xff]
        %v1125 = vld [vmem:[%s301 + $0x98] sm:$0xff]
        %v1126 = vld [vmem:[%s301 + $0xa0] sm:$0xff]
        %v1127 = vld [vmem:[%s301 + $0xa8] sm:$0xff]
        %v1128 = vld [vmem:[%s301 + $0xb0] sm:$0xff]
        %v1129 = vld [vmem:[%s301 + $0xb8] sm:$0xff]
        %v1130 = vld [vmem:[%s301 + $0xc0] sm:$0xff]
        %v1131 = vld [vmem:[%s301 + $0xc8] sm:$0xff]
        %v1132 = vld [vmem:[%s301 + $0xd0] sm:$0xff]
        %v1133 = vld [vmem:[%s301 + $0xd8] sm:$0xff]
        %v1134 = vld [vmem:[%s301 + $0xe0] sm:$0xff]
        %v1135 = vld [vmem:[%s301 + $0xe8] sm:$0xff]
        %v1136 = vld [vmem:[%s301 + $0xf0] sm:$0xff]
        %v1137 = vld [vmem:[%s301 + $0xf8] sm:$0xff]
        %v1138 = vld [vmem:[%s306] sm:$0x3]
        %1139 = vset.pattern.permute.xlu0 0
        %1140 = vperm.xlu0 %1139, %v1106
        %v1141 = vpop.permute.xlu0 %1140
        %1142 = vset.pattern.permute.xlu0 0
        %1143 = vperm.xlu0 %1142, %v1107
        %v1144 = vpop.permute.xlu0 %1143
        %1145 = vset.pattern.permute.xlu0 0
        %1146 = vperm.xlu0 %1145, %v1108
        %v1147 = vpop.permute.xlu0 %1146
        %1148 = vset.pattern.permute.xlu0 0
        %1149 = vperm.xlu0 %1148, %v1109
        %v1150 = vpop.permute.xlu0 %1149
        %1151 = vset.pattern.permute.xlu0 0
        %1152 = vperm.xlu0 %1151, %v1110
        %v1153 = vpop.permute.xlu0 %1152
        %1154 = vset.pattern.permute.xlu0 0
        %1155 = vperm.xlu0 %1154, %v1111
        %v1156 = vpop.permute.xlu0 %1155
        %1157 = vset.pattern.permute.xlu0 0
        %1158 = vperm.xlu0 %1157, %v1112
        %v1159 = vpop.permute.xlu0 %1158
        %1160 = vset.pattern.permute.xlu0 0
        %1161 = vperm.xlu0 %1160, %v1113
        %v1162 = vpop.permute.xlu0 %1161
        %1163 = vset.pattern.permute.xlu0 0
        %1164 = vperm.xlu0 %1163, %v1114
        %v1165 = vpop.permute.xlu0 %1164
        %1166 = vset.pattern.permute.xlu0 0
        %1167 = vperm.xlu0 %1166, %v1115
        %v1168 = vpop.permute.xlu0 %1167
        %1169 = vset.pattern.permute.xlu0 0
        %1170 = vperm.xlu0 %1169, %v1116
        %v1171 = vpop.permute.xlu0 %1170
        %1172 = vset.pattern.permute.xlu0 0
        %1173 = vperm.xlu0 %1172, %v1117
        %v1174 = vpop.permute.xlu0 %1173
        %1175 = vset.pattern.permute.xlu0 0
        %1176 = vperm.xlu0 %1175, %v1118
        %v1177 = vpop.permute.xlu0 %1176
        %1178 = vset.pattern.permute.xlu0 0
        %1179 = vperm.xlu0 %1178, %v1119
        %v1180 = vpop.permute.xlu0 %1179
        %1181 = vset.pattern.permute.xlu0 0
        %1182 = vperm.xlu0 %1181, %v1120
        %v1183 = vpop.permute.xlu0 %1182
        %1184 = vset.pattern.permute.xlu0 0
        %1185 = vperm.xlu0 %1184, %v1121
        %v1186 = vpop.permute.xlu0 %1185
        %1187 = vset.pattern.permute.xlu0 0
        %1188 = vperm.xlu0 %1187, %v1122
        %v1189 = vpop.permute.xlu0 %1188
        %1190 = vset.pattern.permute.xlu0 0
        %1191 = vperm.xlu0 %1190, %v1123
        %v1192 = vpop.permute.xlu0 %1191
        %1193 = vset.pattern.permute.xlu0 0
        %1194 = vperm.xlu0 %1193, %v1124
        %v1195 = vpop.permute.xlu0 %1194
        %1196 = vset.pattern.permute.xlu0 0
        %1197 = vperm.xlu0 %1196, %v1125
        %v1198 = vpop.permute.xlu0 %1197
        %1199 = vset.pattern.permute.xlu0 0
        %1200 = vperm.xlu0 %1199, %v1126
        %v1201 = vpop.permute.xlu0 %1200
        %1202 = vset.pattern.permute.xlu0 0
        %1203 = vperm.xlu0 %1202, %v1127
        %v1204 = vpop.permute.xlu0 %1203
        %1205 = vset.pattern.permute.xlu0 0
        %1206 = vperm.xlu0 %1205, %v1128
        %v1207 = vpop.permute.xlu0 %1206
        %1208 = vset.pattern.permute.xlu0 0
        %1209 = vperm.xlu0 %1208, %v1129
        %v1210 = vpop.permute.xlu0 %1209
        %1211 = vset.pattern.permute.xlu0 0
        %1212 = vperm.xlu0 %1211, %v1130
        %v1213 = vpop.permute.xlu0 %1212
        %1214 = vset.pattern.permute.xlu0 0
        %1215 = vperm.xlu0 %1214, %v1131
        %v1216 = vpop.permute.xlu0 %1215
        %1217 = vset.pattern.permute.xlu0 0
        %1218 = vperm.xlu0 %1217, %v1132
        %v1219 = vpop.permute.xlu0 %1218
        %1220 = vset.pattern.permute.xlu0 0
        %1221 = vperm.xlu0 %1220, %v1133
        %v1222 = vpop.permute.xlu0 %1221
        %1223 = vset.pattern.permute.xlu0 0
        %1224 = vperm.xlu0 %1223, %v1134
        %v1225 = vpop.permute.xlu0 %1224
        %1226 = vset.pattern.permute.xlu0 0
        %1227 = vperm.xlu0 %1226, %v1135
        %v1228 = vpop.permute.xlu0 %1227
        %1229 = vset.pattern.permute.xlu0 0
        %1230 = vperm.xlu0 %1229, %v1136
        %v1231 = vpop.permute.xlu0 %1230
        %1232 = vset.pattern.permute.xlu0 0
        %1233 = vperm.xlu0 %1232, %v1137
        %v1234 = vpop.permute.xlu0 %1233
        %v1235 = vlaneseq
        %v1236 = vshrl.u32 %v1235, 7
        %v1237 = vsub.s32 0, %v1236
        %v1238 = vrot.slane %v1138, %v1237
        %v1239 = vlaneseq
        %v1240 = vshrl.u32 %v1239, 7
        %v1241 = vsub.s32 1, %v1240
        %v1242 = vrot.slane %v1138, %v1241
        %vm1243 = vcmp.eq.s32.totalorder %v1141, %v1238
        %vm1244 = vcmp.eq.s32.totalorder %v1141, %v1242
        %vm1245 = vcmp.eq.s32.totalorder %v1144, %v1238
        %vm1246 = vcmp.eq.s32.totalorder %v1144, %v1242
        %vm1247 = vcmp.eq.s32.totalorder %v1147, %v1238
        %vm1248 = vcmp.eq.s32.totalorder %v1147, %v1242
        %vm1249 = vcmp.eq.s32.totalorder %v1150, %v1238
        %vm1250 = vcmp.eq.s32.totalorder %v1150, %v1242
        %vm1251 = vcmp.eq.s32.totalorder %v1153, %v1238
        %vm1252 = vcmp.eq.s32.totalorder %v1153, %v1242
        %vm1253 = vcmp.eq.s32.totalorder %v1156, %v1238
        %vm1254 = vcmp.eq.s32.totalorder %v1156, %v1242
        %vm1255 = vcmp.eq.s32.totalorder %v1159, %v1238
        %vm1256 = vcmp.eq.s32.totalorder %v1159, %v1242
        %vm1257 = vcmp.eq.s32.totalorder %v1162, %v1238
        %vm1258 = vcmp.eq.s32.totalorder %v1162, %v1242
        %vm1259 = vcmp.eq.s32.totalorder %v1165, %v1238
        %vm1260 = vcmp.eq.s32.totalorder %v1165, %v1242
        %vm1261 = vcmp.eq.s32.totalorder %v1168, %v1238
        %vm1262 = vcmp.eq.s32.totalorder %v1168, %v1242
        %vm1263 = vcmp.eq.s32.totalorder %v1171, %v1238
        %vm1264 = vcmp.eq.s32.totalorder %v1171, %v1242
        %vm1265 = vcmp.eq.s32.totalorder %v1174, %v1238
        %vm1266 = vcmp.eq.s32.totalorder %v1174, %v1242
        %vm1267 = vcmp.eq.s32.totalorder %v1177, %v1238
        %vm1268 = vcmp.eq.s32.totalorder %v1177, %v1242
        %vm1269 = vcmp.eq.s32.totalorder %v1180, %v1238
        %vm1270 = vcmp.eq.s32.totalorder %v1180, %v1242
        %vm1271 = vcmp.eq.s32.totalorder %v1183, %v1238
        %vm1272 = vcmp.eq.s32.totalorder %v1183, %v1242
        %vm1273 = vcmp.eq.s32.totalorder %v1186, %v1238
        %vm1274 = vcmp.eq.s32.totalorder %v1186, %v1242
        %vm1275 = vcmp.eq.s32.totalorder %v1189, %v1238
        %vm1276 = vcmp.eq.s32.totalorder %v1189, %v1242
        %vm1277 = vcmp.eq.s32.totalorder %v1192, %v1238
        %vm1278 = vcmp.eq.s32.totalorder %v1192, %v1242
        %vm1279 = vcmp.eq.s32.totalorder %v1195, %v1238
        %vm1280 = vcmp.eq.s32.totalorder %v1195, %v1242
        %vm1281 = vcmp.eq.s32.totalorder %v1198, %v1238
        %vm1282 = vcmp.eq.s32.totalorder %v1198, %v1242
        %vm1283 = vcmp.eq.s32.totalorder %v1201, %v1238
        %vm1284 = vcmp.eq.s32.totalorder %v1201, %v1242
        %vm1285 = vcmp.eq.s32.totalorder %v1204, %v1238
        %vm1286 = vcmp.eq.s32.totalorder %v1204, %v1242
        %vm1287 = vcmp.eq.s32.totalorder %v1207, %v1238
        %vm1288 = vcmp.eq.s32.totalorder %v1207, %v1242
        %vm1289 = vcmp.eq.s32.totalorder %v1210, %v1238
        %vm1290 = vcmp.eq.s32.totalorder %v1210, %v1242
        %vm1291 = vcmp.eq.s32.totalorder %v1213, %v1238
        %vm1292 = vcmp.eq.s32.totalorder %v1213, %v1242
        %vm1293 = vcmp.eq.s32.totalorder %v1216, %v1238
        %vm1294 = vcmp.eq.s32.totalorder %v1216, %v1242
        %vm1295 = vcmp.eq.s32.totalorder %v1219, %v1238
        %vm1296 = vcmp.eq.s32.totalorder %v1219, %v1242
        %vm1297 = vcmp.eq.s32.totalorder %v1222, %v1238
        %vm1298 = vcmp.eq.s32.totalorder %v1222, %v1242
        %vm1299 = vcmp.eq.s32.totalorder %v1225, %v1238
        %vm1300 = vcmp.eq.s32.totalorder %v1225, %v1242
        %vm1301 = vcmp.eq.s32.totalorder %v1228, %v1238
        %vm1302 = vcmp.eq.s32.totalorder %v1228, %v1242
        %vm1303 = vcmp.eq.s32.totalorder %v1231, %v1238
        %vm1304 = vcmp.eq.s32.totalorder %v1231, %v1242
        %vm1305 = vcmp.eq.s32.totalorder %v1234, %v1238
        %vm1306 = vcmp.eq.s32.totalorder %v1234, %v1242
        %v1307 = vsel %vm1243, %v1042, -1e+30
        %v1308 = vsel %vm1244, %v1043, -1e+30
        %v1309 = vsel %vm1245, %v1044, -1e+30
        %v1310 = vsel %vm1246, %v1045, -1e+30
        %v1311 = vsel %vm1247, %v1046, -1e+30
        %v1312 = vsel %vm1248, %v1047, -1e+30
        %v1313 = vsel %vm1249, %v1048, -1e+30
        %v1314 = vsel %vm1250, %v1049, -1e+30
        %v1315 = vsel %vm1251, %v1050, -1e+30
        %v1316 = vsel %vm1252, %v1051, -1e+30
        %v1317 = vsel %vm1253, %v1052, -1e+30
        %v1318 = vsel %vm1254, %v1053, -1e+30
        %v1319 = vsel %vm1255, %v1054, -1e+30
        %v1320 = vsel %vm1256, %v1055, -1e+30
        %v1321 = vsel %vm1257, %v1056, -1e+30
        %v1322 = vsel %vm1258, %v1057, -1e+30
        %v1323 = vsel %vm1259, %v1058, -1e+30
        %v1324 = vsel %vm1260, %v1059, -1e+30
        %v1325 = vsel %vm1261, %v1060, -1e+30
        %v1326 = vsel %vm1262, %v1061, -1e+30
        %v1327 = vsel %vm1263, %v1062, -1e+30
        %v1328 = vsel %vm1264, %v1063, -1e+30
        %v1329 = vsel %vm1265, %v1064, -1e+30
        %v1330 = vsel %vm1266, %v1065, -1e+30
        %v1331 = vsel %vm1267, %v1066, -1e+30
        %v1332 = vsel %vm1268, %v1067, -1e+30
        %v1333 = vsel %vm1269, %v1068, -1e+30
        %v1334 = vsel %vm1270, %v1069, -1e+30
        %v1335 = vsel %vm1271, %v1070, -1e+30
        %v1336 = vsel %vm1272, %v1071, -1e+30
        %v1337 = vsel %vm1273, %v1072, -1e+30
        %v1338 = vsel %vm1274, %v1073, -1e+30
        %v1339 = vsel %vm1275, %v1074, -1e+30
        %v1340 = vsel %vm1276, %v1075, -1e+30
        %v1341 = vsel %vm1277, %v1076, -1e+30
        %v1342 = vsel %vm1278, %v1077, -1e+30
        %v1343 = vsel %vm1279, %v1078, -1e+30
        %v1344 = vsel %vm1280, %v1079, -1e+30
        %v1345 = vsel %vm1281, %v1080, -1e+30
        %v1346 = vsel %vm1282, %v1081, -1e+30
        %v1347 = vsel %vm1283, %v1082, -1e+30
        %v1348 = vsel %vm1284, %v1083, -1e+30
        %v1349 = vsel %vm1285, %v1084, -1e+30
        %v1350 = vsel %vm1286, %v1085, -1e+30
        %v1351 = vsel %vm1287, %v1086, -1e+30
        %v1352 = vsel %vm1288, %v1087, -1e+30
        %v1353 = vsel %vm1289, %v1088, -1e+30
        %v1354 = vsel %vm1290, %v1089, -1e+30
        %v1355 = vsel %vm1291, %v1090, -1e+30
        %v1356 = vsel %vm1292, %v1091, -1e+30
        %v1357 = vsel %vm1293, %v1092, -1e+30
        %v1358 = vsel %vm1294, %v1093, -1e+30
        %v1359 = vsel %vm1295, %v1094, -1e+30
        %v1360 = vsel %vm1296, %v1095, -1e+30
        %v1361 = vsel %vm1297, %v1096, -1e+30
        %v1362 = vsel %vm1298, %v1097, -1e+30
        %v1363 = vsel %vm1299, %v1098, -1e+30
        %v1364 = vsel %vm1300, %v1099, -1e+30
        %v1365 = vsel %vm1301, %v1100, -1e+30
        %v1366 = vsel %vm1302, %v1101, -1e+30
        %v1367 = vsel %vm1303, %v1102, -1e+30
        %v1368 = vsel %vm1304, %v1103, -1e+30
        %v1369 = vsel %vm1305, %v1104, -1e+30
        %v1370 = vsel %vm1306, %v1105, -1e+30
        %v1371 = vmax.f32 %v1307, %v1308
        %1372 = vmax.xlane.f32.xlu0 %v1371
        %v1373 = vpop.xlane.xlu0 %1372
        %v1374 = vmax.f32 %v1309, %v1310
        %1375 = vmax.xlane.f32.xlu0 %v1374
        %v1376 = vpop.xlane.xlu0 %1375
        %v1377 = vmax.f32 %v1311, %v1312
        %1378 = vmax.xlane.f32.xlu0 %v1377
        %v1379 = vpop.xlane.xlu0 %1378
        %v1380 = vmax.f32 %v1313, %v1314
        %1381 = vmax.xlane.f32.xlu0 %v1380
        %v1382 = vpop.xlane.xlu0 %1381
        %v1383 = vmax.f32 %v1315, %v1316
        %1384 = vmax.xlane.f32.xlu0 %v1383
        %v1385 = vpop.xlane.xlu0 %1384
        %v1386 = vmax.f32 %v1317, %v1318
        %1387 = vmax.xlane.f32.xlu0 %v1386
        %v1388 = vpop.xlane.xlu0 %1387
        %v1389 = vmax.f32 %v1319, %v1320
        %1390 = vmax.xlane.f32.xlu0 %v1389
        %v1391 = vpop.xlane.xlu0 %1390
        %v1392 = vmax.f32 %v1321, %v1322
        %1393 = vmax.xlane.f32.xlu0 %v1392
        %v1394 = vpop.xlane.xlu0 %1393
        %v1395 = vmax.f32 %v1323, %v1324
        %1396 = vmax.xlane.f32.xlu0 %v1395
        %v1397 = vpop.xlane.xlu0 %1396
        %v1398 = vmax.f32 %v1325, %v1326
        %1399 = vmax.xlane.f32.xlu0 %v1398
        %v1400 = vpop.xlane.xlu0 %1399
        %v1401 = vmax.f32 %v1327, %v1328
        %1402 = vmax.xlane.f32.xlu0 %v1401
        %v1403 = vpop.xlane.xlu0 %1402
        %v1404 = vmax.f32 %v1329, %v1330
        %1405 = vmax.xlane.f32.xlu0 %v1404
        %v1406 = vpop.xlane.xlu0 %1405
        %v1407 = vmax.f32 %v1331, %v1332
        %1408 = vmax.xlane.f32.xlu0 %v1407
        %v1409 = vpop.xlane.xlu0 %1408
        %v1410 = vmax.f32 %v1333, %v1334
        %1411 = vmax.xlane.f32.xlu0 %v1410
        %v1412 = vpop.xlane.xlu0 %1411
        %v1413 = vmax.f32 %v1335, %v1336
        %1414 = vmax.xlane.f32.xlu0 %v1413
        %v1415 = vpop.xlane.xlu0 %1414
        %v1416 = vmax.f32 %v1337, %v1338
        %1417 = vmax.xlane.f32.xlu0 %v1416
        %v1418 = vpop.xlane.xlu0 %1417
        %v1419 = vmax.f32 %v1339, %v1340
        %1420 = vmax.xlane.f32.xlu0 %v1419
        %v1421 = vpop.xlane.xlu0 %1420
        %v1422 = vmax.f32 %v1341, %v1342
        %1423 = vmax.xlane.f32.xlu0 %v1422
        %v1424 = vpop.xlane.xlu0 %1423
        %v1425 = vmax.f32 %v1343, %v1344
        %1426 = vmax.xlane.f32.xlu0 %v1425
        %v1427 = vpop.xlane.xlu0 %1426
        %v1428 = vmax.f32 %v1345, %v1346
        %1429 = vmax.xlane.f32.xlu0 %v1428
        %v1430 = vpop.xlane.xlu0 %1429
        %v1431 = vmax.f32 %v1347, %v1348
        %1432 = vmax.xlane.f32.xlu0 %v1431
        %v1433 = vpop.xlane.xlu0 %1432
        %v1434 = vmax.f32 %v1349, %v1350
        %1435 = vmax.xlane.f32.xlu0 %v1434
        %v1436 = vpop.xlane.xlu0 %1435
        %v1437 = vmax.f32 %v1351, %v1352
        %1438 = vmax.xlane.f32.xlu0 %v1437
        %v1439 = vpop.xlane.xlu0 %1438
        %v1440 = vmax.f32 %v1353, %v1354
        %1441 = vmax.xlane.f32.xlu0 %v1440
        %v1442 = vpop.xlane.xlu0 %1441
        %v1443 = vmax.f32 %v1355, %v1356
        %1444 = vmax.xlane.f32.xlu0 %v1443
        %v1445 = vpop.xlane.xlu0 %1444
        %v1446 = vmax.f32 %v1357, %v1358
        %1447 = vmax.xlane.f32.xlu0 %v1446
        %v1448 = vpop.xlane.xlu0 %1447
        %v1449 = vmax.f32 %v1359, %v1360
        %1450 = vmax.xlane.f32.xlu0 %v1449
        %v1451 = vpop.xlane.xlu0 %1450
        %v1452 = vmax.f32 %v1361, %v1362
        %1453 = vmax.xlane.f32.xlu0 %v1452
        %v1454 = vpop.xlane.xlu0 %1453
        %v1455 = vmax.f32 %v1363, %v1364
        %1456 = vmax.xlane.f32.xlu0 %v1455
        %v1457 = vpop.xlane.xlu0 %1456
        %v1458 = vmax.f32 %v1365, %v1366
        %1459 = vmax.xlane.f32.xlu0 %v1458
        %v1460 = vpop.xlane.xlu0 %1459
        %v1461 = vmax.f32 %v1367, %v1368
        %1462 = vmax.xlane.f32.xlu0 %v1461
        %v1463 = vpop.xlane.xlu0 %1462
        %v1464 = vmax.f32 %v1369, %v1370
        %1465 = vmax.xlane.f32.xlu0 %v1464
        %v1466 = vpop.xlane.xlu0 %1465
        %v1467 = vsub.f32 %v1307, %v1373
        %v1468 = vsub.f32 %v1308, %v1373
        %v1469 = vsub.f32 %v1309, %v1376
        %v1470 = vsub.f32 %v1310, %v1376
        %v1471 = vsub.f32 %v1311, %v1379
        %v1472 = vsub.f32 %v1312, %v1379
        %v1473 = vsub.f32 %v1313, %v1382
        %v1474 = vsub.f32 %v1314, %v1382
        %v1475 = vsub.f32 %v1315, %v1385
        %v1476 = vsub.f32 %v1316, %v1385
        %v1477 = vsub.f32 %v1317, %v1388
        %v1478 = vsub.f32 %v1318, %v1388
        %v1479 = vsub.f32 %v1319, %v1391
        %v1480 = vsub.f32 %v1320, %v1391
        %v1481 = vsub.f32 %v1321, %v1394
        %v1482 = vsub.f32 %v1322, %v1394
        %v1483 = vsub.f32 %v1323, %v1397
        %v1484 = vsub.f32 %v1324, %v1397
        %v1485 = vsub.f32 %v1325, %v1400
        %v1486 = vsub.f32 %v1326, %v1400
        %v1487 = vsub.f32 %v1327, %v1403
        %v1488 = vsub.f32 %v1328, %v1403
        %v1489 = vsub.f32 %v1329, %v1406
        %v1490 = vsub.f32 %v1330, %v1406
        %v1491 = vsub.f32 %v1331, %v1409
        %v1492 = vsub.f32 %v1332, %v1409
        %v1493 = vsub.f32 %v1333, %v1412
        %v1494 = vsub.f32 %v1334, %v1412
        %v1495 = vsub.f32 %v1335, %v1415
        %v1496 = vsub.f32 %v1336, %v1415
        %v1497 = vsub.f32 %v1337, %v1418
        %v1498 = vsub.f32 %v1338, %v1418
        %v1499 = vsub.f32 %v1339, %v1421
        %v1500 = vsub.f32 %v1340, %v1421
        %v1501 = vsub.f32 %v1341, %v1424
        %v1502 = vsub.f32 %v1342, %v1424
        %v1503 = vsub.f32 %v1343, %v1427
        %v1504 = vsub.f32 %v1344, %v1427
        %v1505 = vsub.f32 %v1345, %v1430
        %v1506 = vsub.f32 %v1346, %v1430
        %v1507 = vsub.f32 %v1347, %v1433
        %v1508 = vsub.f32 %v1348, %v1433
        %v1509 = vsub.f32 %v1349, %v1436
        %v1510 = vsub.f32 %v1350, %v1436
        %v1511 = vsub.f32 %v1351, %v1439
        %v1512 = vsub.f32 %v1352, %v1439
        %v1513 = vsub.f32 %v1353, %v1442
        %v1514 = vsub.f32 %v1354, %v1442
        %v1515 = vsub.f32 %v1355, %v1445
        %v1516 = vsub.f32 %v1356, %v1445
        %v1517 = vsub.f32 %v1357, %v1448
        %v1518 = vsub.f32 %v1358, %v1448
        %v1519 = vsub.f32 %v1359, %v1451
        %v1520 = vsub.f32 %v1360, %v1451
        %v1521 = vsub.f32 %v1361, %v1454
        %v1522 = vsub.f32 %v1362, %v1454
        %v1523 = vsub.f32 %v1363, %v1457
        %v1524 = vsub.f32 %v1364, %v1457
        %v1525 = vsub.f32 %v1365, %v1460
        %v1526 = vsub.f32 %v1366, %v1460
        %v1527 = vsub.f32 %v1367, %v1463
        %v1528 = vsub.f32 %v1368, %v1463
        %v1529 = vsub.f32 %v1369, %v1466
        %v1530 = vsub.f32 %v1370, %v1466
        %v1531 = vmul.f32 %v1467, 1.442695
        %v1532 = vpow.pop %v1531
        %v1533 = vmul.f32 %v1468, 1.442695
        %v1534 = vpow.pop %v1533
        %v1535 = vmul.f32 %v1469, 1.442695
        %v1536 = vpow.pop %v1535
        %v1537 = vmul.f32 %v1470, 1.442695
        %v1538 = vpow.pop %v1537
        %v1539 = vmul.f32 %v1471, 1.442695
        %v1540 = vpow.pop %v1539
        %v1541 = vmul.f32 %v1472, 1.442695
        %v1542 = vpow.pop %v1541
        %v1543 = vmul.f32 %v1473, 1.442695
        %v1544 = vpow.pop %v1543
        %v1545 = vmul.f32 %v1474, 1.442695
        %v1546 = vpow.pop %v1545
        %v1547 = vmul.f32 %v1475, 1.442695
        %v1548 = vpow.pop %v1547
        %v1549 = vmul.f32 %v1476, 1.442695
        %v1550 = vpow.pop %v1549
        %v1551 = vmul.f32 %v1477, 1.442695
        %v1552 = vpow.pop %v1551
        %v1553 = vmul.f32 %v1478, 1.442695
        %v1554 = vpow.pop %v1553
        %v1555 = vmul.f32 %v1479, 1.442695
        %v1556 = vpow.pop %v1555
        %v1557 = vmul.f32 %v1480, 1.442695
        %v1558 = vpow.pop %v1557
        %v1559 = vmul.f32 %v1481, 1.442695
        %v1560 = vpow.pop %v1559
        %v1561 = vmul.f32 %v1482, 1.442695
        %v1562 = vpow.pop %v1561
        %v1563 = vmul.f32 %v1483, 1.442695
        %v1564 = vpow.pop %v1563
        %v1565 = vmul.f32 %v1484, 1.442695
        %v1566 = vpow.pop %v1565
        %v1567 = vmul.f32 %v1485, 1.442695
        %v1568 = vpow.pop %v1567
        %v1569 = vmul.f32 %v1486, 1.442695
        %v1570 = vpow.pop %v1569
        %v1571 = vmul.f32 %v1487, 1.442695
        %v1572 = vpow.pop %v1571
        %v1573 = vmul.f32 %v1488, 1.442695
        %v1574 = vpow.pop %v1573
        %v1575 = vmul.f32 %v1489, 1.442695
        %v1576 = vpow.pop %v1575
        %v1577 = vmul.f32 %v1490, 1.442695
        %v1578 = vpow.pop %v1577
        %v1579 = vmul.f32 %v1491, 1.442695
        %v1580 = vpow.pop %v1579
        %v1581 = vmul.f32 %v1492, 1.442695
        %v1582 = vpow.pop %v1581
        %v1583 = vmul.f32 %v1493, 1.442695
        %v1584 = vpow.pop %v1583
        %v1585 = vmul.f32 %v1494, 1.442695
        %v1586 = vpow.pop %v1585
        %v1587 = vmul.f32 %v1495, 1.442695
        %v1588 = vpow.pop %v1587
        %v1589 = vmul.f32 %v1496, 1.442695
        %v1590 = vpow.pop %v1589
        %v1591 = vmul.f32 %v1497, 1.442695
        %v1592 = vpow.pop %v1591
        %v1593 = vmul.f32 %v1498, 1.442695
        %v1594 = vpow.pop %v1593
        %v1595 = vmul.f32 %v1499, 1.442695
        %v1596 = vpow.pop %v1595
        %v1597 = vmul.f32 %v1500, 1.442695
        %v1598 = vpow.pop %v1597
        %v1599 = vmul.f32 %v1501, 1.442695
        %v1600 = vpow.pop %v1599
        %v1601 = vmul.f32 %v1502, 1.442695
        %v1602 = vpow.pop %v1601
        %v1603 = vmul.f32 %v1503, 1.442695
        %v1604 = vpow.pop %v1603
        %v1605 = vmul.f32 %v1504, 1.442695
        %v1606 = vpow.pop %v1605
        %v1607 = vmul.f32 %v1505, 1.442695
        %v1608 = vpow.pop %v1607
        %v1609 = vmul.f32 %v1506, 1.442695
        %v1610 = vpow.pop %v1609
        %v1611 = vmul.f32 %v1507, 1.442695
        %v1612 = vpow.pop %v1611
        %v1613 = vmul.f32 %v1508, 1.442695
        %v1614 = vpow.pop %v1613
        %v1615 = vmul.f32 %v1509, 1.442695
        %v1616 = vpow.pop %v1615
        %v1617 = vmul.f32 %v1510, 1.442695
        %v1618 = vpow.pop %v1617
        %v1619 = vmul.f32 %v1511, 1.442695
        %v1620 = vpow.pop %v1619
        %v1621 = vmul.f32 %v1512, 1.442695
        %v1622 = vpow.pop %v1621
        %v1623 = vmul.f32 %v1513, 1.442695
        %v1624 = vpow.pop %v1623
        %v1625 = vmul.f32 %v1514, 1.442695
        %v1626 = vpow.pop %v1625
        %v1627 = vmul.f32 %v1515, 1.442695
        %v1628 = vpow.pop %v1627
        %v1629 = vmul.f32 %v1516, 1.442695
        %v1630 = vpow.pop %v1629
        %v1631 = vmul.f32 %v1517, 1.442695
        %v1632 = vpow.pop %v1631
        %v1633 = vmul.f32 %v1518, 1.442695
        %v1634 = vpow.pop %v1633
        %v1635 = vmul.f32 %v1519, 1.442695
        %v1636 = vpow.pop %v1635
        %v1637 = vmul.f32 %v1520, 1.442695
        %v1638 = vpow.pop %v1637
        %v1639 = vmul.f32 %v1521, 1.442695
        %v1640 = vpow.pop %v1639
        %v1641 = vmul.f32 %v1522, 1.442695
        %v1642 = vpow.pop %v1641
        %v1643 = vmul.f32 %v1523, 1.442695
        %v1644 = vpow.pop %v1643
        %v1645 = vmul.f32 %v1524, 1.442695
        %v1646 = vpow.pop %v1645
        %v1647 = vmul.f32 %v1525, 1.442695
        %v1648 = vpow.pop %v1647
        %v1649 = vmul.f32 %v1526, 1.442695
        %v1650 = vpow.pop %v1649
        %v1651 = vmul.f32 %v1527, 1.442695
        %v1652 = vpow.pop %v1651
        %v1653 = vmul.f32 %v1528, 1.442695
        %v1654 = vpow.pop %v1653
        %v1655 = vmul.f32 %v1529, 1.442695
        %v1656 = vpow.pop %v1655
        %v1657 = vmul.f32 %v1530, 1.442695
        %v1658 = vpow.pop %v1657
        %v1659 = vadd.f32 %v1532, %v1534
        %1660 = vadd.xlane.f32.xlu0 %v1659
        %v1661 = vpop.xlane.xlu0 %1660
        %v1662 = vadd.f32 %v1536, %v1538
        %1663 = vadd.xlane.f32.xlu0 %v1662
        %v1664 = vpop.xlane.xlu0 %1663
        %v1665 = vadd.f32 %v1540, %v1542
        %1666 = vadd.xlane.f32.xlu0 %v1665
        %v1667 = vpop.xlane.xlu0 %1666
        %v1668 = vadd.f32 %v1544, %v1546
        %1669 = vadd.xlane.f32.xlu0 %v1668
        %v1670 = vpop.xlane.xlu0 %1669
        %v1671 = vadd.f32 %v1548, %v1550
        %1672 = vadd.xlane.f32.xlu0 %v1671
        %v1673 = vpop.xlane.xlu0 %1672
        %v1674 = vadd.f32 %v1552, %v1554
        %1675 = vadd.xlane.f32.xlu0 %v1674
        %v1676 = vpop.xlane.xlu0 %1675
        %v1677 = vadd.f32 %v1556, %v1558
        %1678 = vadd.xlane.f32.xlu0 %v1677
        %v1679 = vpop.xlane.xlu0 %1678
        %v1680 = vadd.f32 %v1560, %v1562
        %1681 = vadd.xlane.f32.xlu0 %v1680
        %v1682 = vpop.xlane.xlu0 %1681
        %v1683 = vadd.f32 %v1564, %v1566
        %1684 = vadd.xlane.f32.xlu0 %v1683
        %v1685 = vpop.xlane.xlu0 %1684
        %v1686 = vadd.f32 %v1568, %v1570
        %1687 = vadd.xlane.f32.xlu0 %v1686
        %v1688 = vpop.xlane.xlu0 %1687
        %v1689 = vadd.f32 %v1572, %v1574
        %1690 = vadd.xlane.f32.xlu0 %v1689
        %v1691 = vpop.xlane.xlu0 %1690
        %v1692 = vadd.f32 %v1576, %v1578
        %1693 = vadd.xlane.f32.xlu0 %v1692
        %v1694 = vpop.xlane.xlu0 %1693
        %v1695 = vadd.f32 %v1580, %v1582
        %1696 = vadd.xlane.f32.xlu0 %v1695
        %v1697 = vpop.xlane.xlu0 %1696
        %v1698 = vadd.f32 %v1584, %v1586
        %1699 = vadd.xlane.f32.xlu0 %v1698
        %v1700 = vpop.xlane.xlu0 %1699
        %v1701 = vadd.f32 %v1588, %v1590
        %1702 = vadd.xlane.f32.xlu0 %v1701
        %v1703 = vpop.xlane.xlu0 %1702
        %v1704 = vadd.f32 %v1592, %v1594
        %1705 = vadd.xlane.f32.xlu0 %v1704
        %v1706 = vpop.xlane.xlu0 %1705
        %v1707 = vadd.f32 %v1596, %v1598
        %1708 = vadd.xlane.f32.xlu0 %v1707
        %v1709 = vpop.xlane.xlu0 %1708
        %v1710 = vadd.f32 %v1600, %v1602
        %1711 = vadd.xlane.f32.xlu0 %v1710
        %v1712 = vpop.xlane.xlu0 %1711
        %v1713 = vadd.f32 %v1604, %v1606
        %1714 = vadd.xlane.f32.xlu0 %v1713
        %v1715 = vpop.xlane.xlu0 %1714
        %v1716 = vadd.f32 %v1608, %v1610
        %1717 = vadd.xlane.f32.xlu0 %v1716
        %v1718 = vpop.xlane.xlu0 %1717
        %v1719 = vadd.f32 %v1612, %v1614
        %1720 = vadd.xlane.f32.xlu0 %v1719
        %v1721 = vpop.xlane.xlu0 %1720
        %v1722 = vadd.f32 %v1616, %v1618
        %1723 = vadd.xlane.f32.xlu0 %v1722
        %v1724 = vpop.xlane.xlu0 %1723
        %v1725 = vadd.f32 %v1620, %v1622
        %1726 = vadd.xlane.f32.xlu0 %v1725
        %v1727 = vpop.xlane.xlu0 %1726
        %v1728 = vadd.f32 %v1624, %v1626
        %1729 = vadd.xlane.f32.xlu0 %v1728
        %v1730 = vpop.xlane.xlu0 %1729
        %v1731 = vadd.f32 %v1628, %v1630
        %1732 = vadd.xlane.f32.xlu0 %v1731
        %v1733 = vpop.xlane.xlu0 %1732
        %v1734 = vadd.f32 %v1632, %v1634
        %1735 = vadd.xlane.f32.xlu0 %v1734
        %v1736 = vpop.xlane.xlu0 %1735
        %v1737 = vadd.f32 %v1636, %v1638
        %1738 = vadd.xlane.f32.xlu0 %v1737
        %v1739 = vpop.xlane.xlu0 %1738
        %v1740 = vadd.f32 %v1640, %v1642
        %1741 = vadd.xlane.f32.xlu0 %v1740
        %v1742 = vpop.xlane.xlu0 %1741
        %v1743 = vadd.f32 %v1644, %v1646
        %1744 = vadd.xlane.f32.xlu0 %v1743
        %v1745 = vpop.xlane.xlu0 %1744
        %v1746 = vadd.f32 %v1648, %v1650
        %1747 = vadd.xlane.f32.xlu0 %v1746
        %v1748 = vpop.xlane.xlu0 %1747
        %v1749 = vadd.f32 %v1652, %v1654
        %1750 = vadd.xlane.f32.xlu0 %v1749
        %v1751 = vpop.xlane.xlu0 %1750
        %v1752 = vadd.f32 %v1656, %v1658
        %1753 = vadd.xlane.f32.xlu0 %v1752
        %v1754 = vpop.xlane.xlu0 %1753
        %v1755 = vrcp.pop %v1661
        %v1756 = vrcp.pop %v1664
        %v1757 = vrcp.pop %v1667
        %v1758 = vrcp.pop %v1670
        %v1759 = vrcp.pop %v1673
        %v1760 = vrcp.pop %v1676
        %v1761 = vrcp.pop %v1679
        %v1762 = vrcp.pop %v1682
        %v1763 = vrcp.pop %v1685
        %v1764 = vrcp.pop %v1688
        %v1765 = vrcp.pop %v1691
        %v1766 = vrcp.pop %v1694
        %v1767 = vrcp.pop %v1697
        %v1768 = vrcp.pop %v1700
        %v1769 = vrcp.pop %v1703
        %v1770 = vrcp.pop %v1706
        %v1771 = vrcp.pop %v1709
        %v1772 = vrcp.pop %v1712
        %v1773 = vrcp.pop %v1715
        %v1774 = vrcp.pop %v1718
        %v1775 = vrcp.pop %v1721
        %v1776 = vrcp.pop %v1724
        %v1777 = vrcp.pop %v1727
        %v1778 = vrcp.pop %v1730
        %v1779 = vrcp.pop %v1733
        %v1780 = vrcp.pop %v1736
        %v1781 = vrcp.pop %v1739
        %v1782 = vrcp.pop %v1742
        %v1783 = vrcp.pop %v1745
        %v1784 = vrcp.pop %v1748
        %v1785 = vrcp.pop %v1751
        %v1786 = vrcp.pop %v1754
        %v1787 = vmul.f32 %v1532, %v1755
        %v1788 = vmul.f32 %v1534, %v1755
        %v1789 = vmul.f32 %v1536, %v1756
        %v1790 = vmul.f32 %v1538, %v1756
        %v1791 = vmul.f32 %v1540, %v1757
        %v1792 = vmul.f32 %v1542, %v1757
        %v1793 = vmul.f32 %v1544, %v1758
        %v1794 = vmul.f32 %v1546, %v1758
        %v1795 = vmul.f32 %v1548, %v1759
        %v1796 = vmul.f32 %v1550, %v1759
        %v1797 = vmul.f32 %v1552, %v1760
        %v1798 = vmul.f32 %v1554, %v1760
        %v1799 = vmul.f32 %v1556, %v1761
        %v1800 = vmul.f32 %v1558, %v1761
        %v1801 = vmul.f32 %v1560, %v1762
        %v1802 = vmul.f32 %v1562, %v1762
        %v1803 = vmul.f32 %v1564, %v1763
        %v1804 = vmul.f32 %v1566, %v1763
        %v1805 = vmul.f32 %v1568, %v1764
        %v1806 = vmul.f32 %v1570, %v1764
        %v1807 = vmul.f32 %v1572, %v1765
        %v1808 = vmul.f32 %v1574, %v1765
        %v1809 = vmul.f32 %v1576, %v1766
        %v1810 = vmul.f32 %v1578, %v1766
        %v1811 = vmul.f32 %v1580, %v1767
        %v1812 = vmul.f32 %v1582, %v1767
        %v1813 = vmul.f32 %v1584, %v1768
        %v1814 = vmul.f32 %v1586, %v1768
        %v1815 = vmul.f32 %v1588, %v1769
        %v1816 = vmul.f32 %v1590, %v1769
        %v1817 = vmul.f32 %v1592, %v1770
        %v1818 = vmul.f32 %v1594, %v1770
        %v1819 = vmul.f32 %v1596, %v1771
        %v1820 = vmul.f32 %v1598, %v1771
        %v1821 = vmul.f32 %v1600, %v1772
        %v1822 = vmul.f32 %v1602, %v1772
        %v1823 = vmul.f32 %v1604, %v1773
        %v1824 = vmul.f32 %v1606, %v1773
        %v1825 = vmul.f32 %v1608, %v1774
        %v1826 = vmul.f32 %v1610, %v1774
        %v1827 = vmul.f32 %v1612, %v1775
        %v1828 = vmul.f32 %v1614, %v1775
        %v1829 = vmul.f32 %v1616, %v1776
        %v1830 = vmul.f32 %v1618, %v1776
        %v1831 = vmul.f32 %v1620, %v1777
        %v1832 = vmul.f32 %v1622, %v1777
        %v1833 = vmul.f32 %v1624, %v1778
        %v1834 = vmul.f32 %v1626, %v1778
        %v1835 = vmul.f32 %v1628, %v1779
        %v1836 = vmul.f32 %v1630, %v1779
        %v1837 = vmul.f32 %v1632, %v1780
        %v1838 = vmul.f32 %v1634, %v1780
        %v1839 = vmul.f32 %v1636, %v1781
        %v1840 = vmul.f32 %v1638, %v1781
        %v1841 = vmul.f32 %v1640, %v1782
        %v1842 = vmul.f32 %v1642, %v1782
        %v1843 = vmul.f32 %v1644, %v1783
        %v1844 = vmul.f32 %v1646, %v1783
        %v1845 = vmul.f32 %v1648, %v1784
        %v1846 = vmul.f32 %v1650, %v1784
        %v1847 = vmul.f32 %v1652, %v1785
        %v1848 = vmul.f32 %v1654, %v1785
        %v1849 = vmul.f32 %v1656, %v1786
        %v1850 = vmul.f32 %v1658, %v1786
        %v1851 = vpack.c.bf16 %v1789, %v1787
        %v1852 = vpack.c.bf16 %v1790, %v1788
        %v1853 = vpack.c.bf16 %v1793, %v1791
        %v1854 = vpack.c.bf16 %v1794, %v1792
        %v1855 = vpack.c.bf16 %v1797, %v1795
        %v1856 = vpack.c.bf16 %v1798, %v1796
        %v1857 = vpack.c.bf16 %v1801, %v1799
        %v1858 = vpack.c.bf16 %v1802, %v1800
        %v1859 = vpack.c.bf16 %v1805, %v1803
        %v1860 = vpack.c.bf16 %v1806, %v1804
        %v1861 = vpack.c.bf16 %v1809, %v1807
        %v1862 = vpack.c.bf16 %v1810, %v1808
        %v1863 = vpack.c.bf16 %v1813, %v1811
        %v1864 = vpack.c.bf16 %v1814, %v1812
        %v1865 = vpack.c.bf16 %v1817, %v1815
        %v1866 = vpack.c.bf16 %v1818, %v1816
        %v1867 = vpack.c.bf16 %v1821, %v1819
        %v1868 = vpack.c.bf16 %v1822, %v1820
        %v1869 = vpack.c.bf16 %v1825, %v1823
        %v1870 = vpack.c.bf16 %v1826, %v1824
        %v1871 = vpack.c.bf16 %v1829, %v1827
        %v1872 = vpack.c.bf16 %v1830, %v1828
        %v1873 = vpack.c.bf16 %v1833, %v1831
        %v1874 = vpack.c.bf16 %v1834, %v1832
        %v1875 = vpack.c.bf16 %v1837, %v1835
        %v1876 = vpack.c.bf16 %v1838, %v1836
        %v1877 = vpack.c.bf16 %v1841, %v1839
        %v1878 = vpack.c.bf16 %v1842, %v1840
        %v1879 = vpack.c.bf16 %v1845, %v1843
        %v1880 = vpack.c.bf16 %v1846, %v1844
        %v1881 = vpack.c.bf16 %v1849, %v1847
        %v1882 = vpack.c.bf16 %v1850, %v1848
        %1883 = vmatprep.subr.bf16.mxu0 0
        %1884 = vmatpush1.bf16.msra.mxu0 %v833
        %1885 = vmatprep.subr.bf16.mxu0 0
        %1886 = vmatpush1.bf16.msra.mxu0 %v834
        %1887 = vmatprep.subr.bf16.mxu0 0
        %1888 = vmatpush1.bf16.msra.mxu0 %v835
        %1889 = vmatprep.subr.bf16.mxu0 0
        %1890 = vmatpush1.bf16.msra.mxu0 %v836
        %1891 = vmatprep.subr.bf16.mxu0 0
        %1892 = vmatpush1.bf16.msra.mxu0 %v837
        %1893 = vmatprep.subr.bf16.mxu0 0
        %1894 = vmatpush1.bf16.msra.mxu0 %v838
        %1895 = vmatprep.subr.bf16.mxu0 0
        %1896 = vmatpush1.bf16.msra.mxu0 %v839
        %1897 = vmatprep.subr.bf16.mxu0 0
        %1898 = vmatpush1.bf16.msra.mxu0 %v840
        %1899 = vmatprep.subr.bf16.mxu0 0
        %1900 = vmatpush1.bf16.msra.mxu0 %v841
        %1901 = vmatprep.subr.bf16.mxu0 0
        %1902 = vmatpush1.bf16.msra.mxu0 %v842
        %1903 = vmatprep.subr.bf16.mxu0 0
        %1904 = vmatpush1.bf16.msra.mxu0 %v843
        %1905 = vmatprep.subr.bf16.mxu0 0
        %1906 = vmatpush1.bf16.msra.mxu0 %v844
        %1907 = vmatprep.subr.bf16.mxu0 0
        %1908 = vmatpush1.bf16.msra.mxu0 %v845
        %1909 = vmatprep.subr.bf16.mxu0 0
        %1910 = vmatpush1.bf16.msra.mxu0 %v846
        %1911 = vmatprep.subr.bf16.mxu0 0
        %1912 = vmatpush1.bf16.msra.mxu0 %v847
        %1913 = vmatprep.subr.bf16.mxu0 0
        %1914 = vmatpush1.bf16.msra.mxu0 %v848
        %1915 = vmatprep.mubr.bf16.mxu0 %v1852
        %1916 = vmatmul.mubr.bf16.gmra.mrb[0].mxu0 %v1851
        %v1917 = vpop.f32.mrb[0].mxu0
        %v1918 = vadd.f32 0.0, %v1917
        %v1919 = vpop.f32.mrb[0].mxu0
        %v1920 = vpop.f32.mrb[0].mxu0
        %v1921 = vadd.f32 0.0, %v1920
        %v1922 = vpop.f32.mrb[0].mxu0
        %1923 = vmatprep.mubr.bf16.mxu0 %v1854
        %1924 = vmatmul.mubr.bf16.gmra.mrb[0].mxu0 %v1853
        %v1925 = vpop.f32.mrb[0].mxu0
        %v1926 = vadd.f32 0.0, %v1925
        %v1927 = vpop.f32.mrb[0].mxu0
        %v1928 = vpop.f32.mrb[0].mxu0
        %v1929 = vadd.f32 0.0, %v1928
        %v1930 = vpop.f32.mrb[0].mxu0
        %1931 = vmatprep.mubr.bf16.mxu0 %v1856
        %1932 = vmatmul.mubr.bf16.gmra.mrb[0].mxu0 %v1855
        %v1933 = vpop.f32.mrb[0].mxu0
        %v1934 = vadd.f32 0.0, %v1933
        %v1935 = vpop.f32.mrb[0].mxu0
        %v1936 = vpop.f32.mrb[0].mxu0
        %v1937 = vadd.f32 0.0, %v1936
        %v1938 = vpop.f32.mrb[0].mxu0
        %1939 = vmatprep.mubr.bf16.mxu0 %v1858
        %1940 = vmatmul.mubr.bf16.gmra.mrb[0].mxu0 %v1857
        %v1941 = vpop.f32.mrb[0].mxu0
        %v1942 = vadd.f32 0.0, %v1941
        %v1943 = vpop.f32.mrb[0].mxu0
        %v1944 = vpop.f32.mrb[0].mxu0
        %v1945 = vadd.f32 0.0, %v1944
        %v1946 = vpop.f32.mrb[0].mxu0
        %1947 = vmatprep.mubr.bf16.mxu0 %v1860
        %1948 = vmatmul.mubr.bf16.gmra.mrb[0].mxu0 %v1859
        %v1949 = vpop.f32.mrb[0].mxu0
        %v1950 = vadd.f32 0.0, %v1949
        %v1951 = vpop.f32.mrb[0].mxu0
        %v1952 = vpop.f32.mrb[0].mxu0
        %v1953 = vadd.f32 0.0, %v1952
        %v1954 = vpop.f32.mrb[0].mxu0
        %1955 = vmatprep.mubr.bf16.mxu0 %v1862
        %1956 = vmatmul.mubr.bf16.gmra.mrb[0].mxu0 %v1861
        %v1957 = vpop.f32.mrb[0].mxu0
        %v1958 = vadd.f32 0.0, %v1957
        %v1959 = vpop.f32.mrb[0].mxu0
        %v1960 = vpop.f32.mrb[0].mxu0
        %v1961 = vadd.f32 0.0, %v1960
        %v1962 = vpop.f32.mrb[0].mxu0
        %1963 = vmatprep.mubr.bf16.mxu0 %v1864
        %1964 = vmatmul.mubr.bf16.gmra.mrb[0].mxu0 %v1863
        %v1965 = vpop.f32.mrb[0].mxu0
        %v1966 = vadd.f32 0.0, %v1965
        %v1967 = vpop.f32.mrb[0].mxu0
        %v1968 = vpop.f32.mrb[0].mxu0
        %v1969 = vadd.f32 0.0, %v1968
        %v1970 = vpop.f32.mrb[0].mxu0
        %1971 = vmatprep.mubr.bf16.mxu0 %v1866
        %1972 = vmatmul.mubr.bf16.gmra.mrb[0].mxu0 %v1865
        %v1973 = vpop.f32.mrb[0].mxu0
        %v1974 = vadd.f32 0.0, %v1973
        %v1975 = vpop.f32.mrb[0].mxu0
        %v1976 = vpop.f32.mrb[0].mxu0
        %v1977 = vadd.f32 0.0, %v1976
        %v1978 = vpop.f32.mrb[0].mxu0
        %1979 = vmatprep.mubr.bf16.mxu0 %v1868
        %1980 = vmatmul.mubr.bf16.gmra.mrb[0].mxu0 %v1867
        %v1981 = vpop.f32.mrb[0].mxu0
        %v1982 = vadd.f32 0.0, %v1981
        %v1983 = vpop.f32.mrb[0].mxu0
        %v1984 = vpop.f32.mrb[0].mxu0
        %v1985 = vadd.f32 0.0, %v1984
        %v1986 = vpop.f32.mrb[0].mxu0
        %1987 = vmatprep.mubr.bf16.mxu0 %v1870
        %1988 = vmatmul.mubr.bf16.gmra.mrb[0].mxu0 %v1869
        %v1989 = vpop.f32.mrb[0].mxu0
        %v1990 = vadd.f32 0.0, %v1989
        %v1991 = vpop.f32.mrb[0].mxu0
        %v1992 = vpop.f32.mrb[0].mxu0
        %v1993 = vadd.f32 0.0, %v1992
        %v1994 = vpop.f32.mrb[0].mxu0
        %1995 = vmatprep.mubr.bf16.mxu0 %v1872
        %1996 = vmatmul.mubr.bf16.gmra.mrb[0].mxu0 %v1871
        %v1997 = vpop.f32.mrb[0].mxu0
        %v1998 = vadd.f32 0.0, %v1997
        %v1999 = vpop.f32.mrb[0].mxu0
        %v2000 = vpop.f32.mrb[0].mxu0
        %v2001 = vadd.f32 0.0, %v2000
        %v2002 = vpop.f32.mrb[0].mxu0
        %2003 = vmatprep.mubr.bf16.mxu0 %v1874
        %2004 = vmatmul.mubr.bf16.gmra.mrb[0].mxu0 %v1873
        %v2005 = vpop.f32.mrb[0].mxu0
        %v2006 = vadd.f32 0.0, %v2005
        %v2007 = vpop.f32.mrb[0].mxu0
        %v2008 = vpop.f32.mrb[0].mxu0
        %v2009 = vadd.f32 0.0, %v2008
        %v2010 = vpop.f32.mrb[0].mxu0
        %2011 = vmatprep.mubr.bf16.mxu0 %v1876
        %2012 = vmatmul.mubr.bf16.gmra.mrb[0].mxu0 %v1875
        %v2013 = vpop.f32.mrb[0].mxu0
        %v2014 = vadd.f32 0.0, %v2013
        %v2015 = vpop.f32.mrb[0].mxu0
        %v2016 = vpop.f32.mrb[0].mxu0
        %v2017 = vadd.f32 0.0, %v2016
        %v2018 = vpop.f32.mrb[0].mxu0
        %2019 = vmatprep.mubr.bf16.mxu0 %v1878
        %2020 = vmatmul.mubr.bf16.gmra.mrb[0].mxu0 %v1877
        %v2021 = vpop.f32.mrb[0].mxu0
        %v2022 = vadd.f32 0.0, %v2021
        %v2023 = vpop.f32.mrb[0].mxu0
        %v2024 = vpop.f32.mrb[0].mxu0
        %v2025 = vadd.f32 0.0, %v2024
        %v2026 = vpop.f32.mrb[0].mxu0
        %2027 = vmatprep.mubr.bf16.mxu0 %v1880
        %2028 = vmatmul.mubr.bf16.gmra.mrb[0].mxu0 %v1879
        %v2029 = vpop.f32.mrb[0].mxu0
        %v2030 = vadd.f32 0.0, %v2029
        %v2031 = vpop.f32.mrb[0].mxu0
        %v2032 = vpop.f32.mrb[0].mxu0
        %v2033 = vadd.f32 0.0, %v2032
        %v2034 = vpop.f32.mrb[0].mxu0
        %2035 = vmatprep.mubr.bf16.mxu0 %v1882
        %2036 = vmatmul.mubr.bf16.gmra.mrb[0].mxu0 %v1881
        %v2037 = vpop.f32.mrb[0].mxu0
        %v2038 = vadd.f32 0.0, %v2037
        %v2039 = vpop.f32.mrb[0].mxu0
        %v2040 = vpop.f32.mrb[0].mxu0
        %v2041 = vadd.f32 0.0, %v2040
        %v2042 = vpop.f32.mrb[0].mxu0
        %2043 = vdwg.mxu0
        %s2044 = smul.u32 %s20, 16
        %v2045 = vlaneseq
        %v2046 = vshrl.u32 %v2045, 7
        %v2047 = vadd.s32 %v2046, 8
        %v2048 = vstv %s2044
        %v2049 = vadd.s32 %v2048, %v2046
        %v2050 = vadd.s32 %v2048, %v2047
        %vm2051 = vcmp.eq.s32.totalorder %v2049, %v1238
        %vm2052 = vcmp.eq.s32.totalorder %v2049, %v1242
        %vm2053 = vcmp.eq.s32.totalorder %v2050, %v1238
        %vm2054 = vcmp.eq.s32.totalorder %v2050, %v1242
        %v2055 = vld [vmem:[%s311] sm:$0xff]
        %v2056 = vld [vmem:[%s311 + $0x8] sm:$0xff]
        %2058 = vset.pattern.permute.xlu0 0
        %2059 = vperm.xlu0 %2058, %v2055
        %v2060 = vpop.permute.xlu0 %2059
        %2063 = vset.pattern.permute.xlu0 0
        %2064 = vperm.xlu0 %2063, %v2056
        %v2065 = vpop.permute.xlu0 %2064
        %v2067 = vsel %vm2051, %v2060, 0.0
        %v2068 = vsel %vm2052, %v2060, 0.0
        %v2069 = vsel %vm2053, %v2065, 0.0
        %v2070 = vsel %vm2054, %v2065, 0.0
        %2071 = vmatprep.subr.mxu0 0.0
        %2072 = vmatpush1.msra.mxu0 %v1918
        %2073 = vmatprep.subr.mxu0 0.0
        %2074 = vmatpush1.msra.mxu0 %v1921
        %2075 = vmatprep.subr.mxu0 0.0
        %2076 = vmatpush1.msra.mxu0 %v1926
        %2077 = vmatprep.subr.mxu0 0.0
        %2078 = vmatpush1.msra.mxu0 %v1929
        %2079 = vmatprep.subr.mxu0 0.0
        %2080 = vmatpush1.msra.mxu0 %v1934
        %2081 = vmatprep.subr.mxu0 0.0
        %2082 = vmatpush1.msra.mxu0 %v1937
        %2083 = vmatprep.subr.mxu0 0.0
        %2084 = vmatpush1.msra.mxu0 %v1942
        %2085 = vmatprep.subr.mxu0 0.0
        %2086 = vmatpush1.msra.mxu0 %v1945
        %2087 = vmatprep.subr.mxu0 0.0
        %2088 = vmatpush1.msra.mxu0 %v1950
        %2089 = vmatprep.subr.mxu0 0.0
        %2090 = vmatpush1.msra.mxu0 %v1953
        %2091 = vmatprep.subr.mxu0 0.0
        %2092 = vmatpush1.msra.mxu0 %v1958
        %2093 = vmatprep.subr.mxu0 0.0
        %2094 = vmatpush1.msra.mxu0 %v1961
        %2095 = vmatprep.subr.mxu0 0.0
        %2096 = vmatpush1.msra.mxu0 %v1966
        %2097 = vmatprep.subr.mxu0 0.0
        %2098 = vmatpush1.msra.mxu0 %v1969
        %2099 = vmatprep.subr.mxu0 0.0
        %2100 = vmatpush1.msra.mxu0 %v1974
        %2101 = vmatprep.subr.mxu0 0.0
        %2102 = vmatpush1.msra.mxu0 %v1977
        %2103 = vmatprep.subr.mxu0 0.0
        %2104 = vmatpush1.msra.mxu0 %v1982
        %2105 = vmatprep.subr.mxu0 0.0
        %2106 = vmatpush1.msra.mxu0 %v1985
        %2107 = vmatprep.subr.mxu0 0.0
        %2108 = vmatpush1.msra.mxu0 %v1990
        %2109 = vmatprep.subr.mxu0 0.0
        %2110 = vmatpush1.msra.mxu0 %v1993
        %2111 = vmatprep.subr.mxu0 0.0
        %2112 = vmatpush1.msra.mxu0 %v1998
        %2113 = vmatprep.subr.mxu0 0.0
        %2114 = vmatpush1.msra.mxu0 %v2001
        %2115 = vmatprep.subr.mxu0 0.0
        %2116 = vmatpush1.msra.mxu0 %v2006
        %2117 = vmatprep.subr.mxu0 0.0
        %2118 = vmatpush1.msra.mxu0 %v2009
        %2119 = vmatprep.subr.mxu0 0.0
        %2120 = vmatpush1.msra.mxu0 %v2014
        %2121 = vmatprep.subr.mxu0 0.0
        %2122 = vmatpush1.msra.mxu0 %v2017
        %2123 = vmatprep.subr.mxu0 0.0
        %2124 = vmatpush1.msra.mxu0 %v2022
        %2125 = vmatprep.subr.mxu0 0.0
        %2126 = vmatpush1.msra.mxu0 %v2025
        %2127 = vmatprep.subr.mxu0 0.0
        %2128 = vmatpush1.msra.mxu0 %v2030
        %2129 = vmatprep.subr.mxu0 0.0
        %2130 = vmatpush1.msra.mxu0 %v2033
        %2131 = vmatprep.subr.mxu0 0.0
        %2132 = vmatpush1.msra.mxu0 %v2038
        %2133 = vmatprep.subr.mxu0 0.0
        %2134 = vmatpush1.msra.mxu0 %v2041
        %2135 = vmatprep.mubr.f32.mxu0 %v2068
        %2136 = vmatmul.mubr.f32.gmra.mrb[0].mxu0 %v2067
        %v2137 = vpop.f32.mrb[0].mxu0
        %v2138 = vadd.f32 0.0, %v2137
        %v2139 = vpop.f32.mrb[0].mxu0
        %2140 = vmatprep.mubr.f32.mxu0 %v2070
        %2141 = vmatmul.mubr.f32.gmra.mrb[0].mxu0 %v2069
        %v2142 = vpop.f32.mrb[0].mxu0
        %v2143 = vadd.f32 0.0, %v2142
        %v2144 = vpop.f32.mrb[0].mxu0
        %2145 = vdwg.mxu0
        %2146 = vst [vmem:[%s290] sm:$0xff] %v2138
        %2147 = vst [vmem:[%s290 + $0x8] sm:$0xff] %v2143
        %s2148 = sand.u32 %s174, 1
        %s2149 = scalar_lea.sflag [#allocation3], %s2148
        %s2150 = sand.u32 %s174, 1
        %s2151 = smul.addr %s2150, 16
        %s2152 = scalar_lea.vmem [#allocation2], %s2151
        // Predicated region
        $region45: #{tpu_custom_call.1} parent=43 // pred_check
          %p2153 = pneg %p184
        $region46: #{tpu_custom_call.1} parent=43 // pred_check_branch
          %2155 = sbr.rel (%p2153) target = $region48
        $region47: #{tpu_custom_call.1} parent=43 // pred_region
          %s2156 = smul.u32 2, %s20
          %s2158 = ssub.s32 256, 256
          %2159 = vsyncadd %s2149, %s2158
          %s2160 = smul.addr %s2156, 128
          %s2161 = scalar_lea.hbm %s6, %s2160
          %s2162 = sshll.u32 %s2152, 4
          %s2163 = int_to_ptr.vmem [resolvable:$true] %s2162
          %2168 = dma.vmem_to_hbm [thread:$0]  %s2163, 256, %s2161, %s2149, 128, 128, 8
        $region48: #{tpu_custom_call.1} parent=43 // pred_fallthru
          _
      $region44: #{tpu_custom_call.1} parent=5 // pred_fallthru
        _
      %p2169 = scmp.le.s32.totalorder 2, %s15
      // Predicated region
      $region49: #{tpu_custom_call.1} parent=5 // pred_check
        %p2170 = pneg %p2169
      $region50: #{tpu_custom_call.1} parent=5 // pred_check_branch
        %2172 = sbr.rel (%p2170) target = $region52
      $region51: #{tpu_custom_call.1} parent=5 // pred_region
        %s2173 = ssub.s32 %s15, 2
        // Predicated region
        $region53: #{tpu_custom_call.1} parent=51 // pred_check
          %p2174 = pneg %p190
        $region54: #{tpu_custom_call.1} parent=51 // pred_check_branch
          %2176 = sbr.rel (%p2174) target = $region56
        $region55: #{tpu_custom_call.1} parent=51 // pred_region
          %s2177 = sand.u32 %s175, 1
          %s2178 = scalar_lea.sflag [#allocation3], %s2177
          %s2179 = sand.u32 %s175, 1
          %s2180 = smul.addr %s2179, 16
          %s2181 = scalar_lea.vmem [#allocation2], %s2180
          %2182 = dma.done %s2178, 256
        $region56: #{tpu_custom_call.1} parent=51 // pred_fallthru
          _
      $region52: #{tpu_custom_call.1} parent=5 // pred_fallthru
        _
    $region6: #{tpu_custom_call.1} parent=1 // loop_footer
      %s19 = sadd.s32 1, %s15
    $region7: #{tpu_custom_call.1} parent=1 // loop_footer_branch
      %14 = sbr.rel target = $region3
    $region8: #{tpu_custom_call.1} parent=1 // loop_exit
      _
    %2183 = vsyncpa [#allocation3], 1
    %s2184 = scalar_lea.sflag [#allocation3], 1
    %2185 = vsyncpa %s2184, 1

</llo_original>
